<compile_context>
chip_gen: v6e
topology: v6e:2x2x1
jax: 0.10.0
libtpu: 0.0.40
codegen_flags: <defaults>
</compile_context>

<pallas_src>
import functools

import jax
import jax.numpy as jnp
from jax import lax
from jax.experimental import pallas as pl
from jax.experimental.pallas import tpu as pltpu


def _round_up(x, m):
    return (x + m - 1) // m * m


# ----------------------------------------------------------------------------
# pltpu.roll probe: pin the rotate direction (and availability) at runtime so
# the conv taps can never silently swap left/right.
# ----------------------------------------------------------------------------
@functools.lru_cache(maxsize=1)
def _roll_mode():
    """Returns "fwd" (jnp.roll convention), "rev", or "concat" fallback."""
    rows = 160  # multi-tile along sublanes, like the real use.

    def k(x_ref, o_ref):
        o_ref[...] = pltpu.roll(x_ref[...], shift=1, axis=0)

    x = jnp.broadcast_to(jnp.arange(rows, dtype=jnp.float32)[:, None],
                         (rows, 128))
    try:
        y = pl.pallas_call(
            k, out_shape=jax.ShapeDtypeStruct((rows, 128), jnp.float32))(x)
        y = jax.block_until_ready(y)
    except Exception:  # rotate not supported here -> concatenate fallback
        return "concat"
    if jnp.allclose(y, jnp.roll(x, 1, axis=0)):
        return "fwd"
    if jnp.allclose(y, jnp.roll(x, -1, axis=0)):
        return "rev"
    return "concat"


def _shift_rows(a, delta, mode):
    """result[i] = a[(i + delta) % R] along axis 0, delta in {-1, +1}."""
    R = a.shape[0]
    if mode == "fwd":                       # roll(a, s)[i] == a[i - s]
        return pltpu.roll(a, shift=(-delta) % R, axis=0)
    if mode == "rev":                       # roll(a, s)[i] == a[i + s]
        return pltpu.roll(a, shift=delta % R, axis=0)
    # Safe (but slightly slower) fallback: concatenate of slices.
    if delta == 1:
        return jnp.concatenate([a[1:], a[:1]], axis=0)
    return jnp.concatenate([a[R - 1:], a[:R - 1]], axis=0)


# ----------------------------------------------------------------------------
# Kernel
# ----------------------------------------------------------------------------
def _bottleneck_kernel(x_ref, w1_ref, w2_ref, w3_ref, b1_ref, b2_ref, b3_ref,
                       o_ref, *, H, W, WR, mode):
    Cp = x_ref.shape[-1]          # padded in/out channels (multiple of 128)
    Pp = w1_ref.shape[-1]         # padded planes          (multiple of 128)
    HW = H * W
    R = (H + 2) * WR

    # ---- conv1 (1x1) + bn1 (scale folded into w1) + relu -------------------
    xa = x_ref[0].reshape(HW, Cp).astype(jnp.bfloat16)       # bf16 MXU operand
    y1 = jnp.dot(xa, w1_ref[...], preferred_element_type=jnp.float32)
    y1 = jnp.maximum(y1 + b1_ref[...], 0.0)                  # (HW, Pp) f32

    # ---- conv2 (3x3, pad=1) + bn2 + relu ------------------------------------
    # Row-major padded staging value (no VMEM scratch, no per-step re-zero):
    #   block 0      : zeros (top pad)
    #   block 1 + h  : y1 row h in cols [0, W), zeros in cols [W, WR)
    #   block H + 1  : zeros (bottom pad)
    # With the zero pad on the high side of each row, flat index f-1 / f+1 is
    # exactly the left / right spatial neighbour (incl. boundary zeros), so the
    # dx taps are two XLU rotations; dy taps are aligned leading-axis slices.
    y1 = y1.reshape(H, W, Pp)
    y1 = jnp.concatenate(
        [y1, jnp.zeros((H, WR - W, Pp), jnp.float32)], axis=1)      # (H, WR, Pp)
    zrow = jnp.zeros((1, WR, Pp), jnp.float32)
    ypf = jnp.concatenate([zrow, y1, zrow], axis=0).reshape(R, Pp)  # (R, Pp)

    left = _shift_rows(ypf, -1, mode)    # left[f]  == ypf[f - 1]
    right = _shift_rows(ypf, +1, mode)   # right[f] == ypf[f + 1]
    # im2col along dx, cast to bf16 once: (R, 3*Pp), K-order = [dx=0,1,2].
    merged = jnp.concatenate(
        [left.astype(jnp.bfloat16), ypf.astype(jnp.bfloat16),
         right.astype(jnp.bfloat16)], axis=1)

    acc = jnp.zeros((H * WR, Pp), jnp.float32)
    for dy in range(3):                       # 3 big-K (K = 3*Pp) MXU matmuls
        patch = merged[dy * WR:dy * WR + H * WR, :]
        acc = acc + jnp.dot(patch, w2_ref[dy],
                            preferred_element_type=jnp.float32)
    y2 = jnp.maximum(acc + b2_ref[...], 0.0).astype(jnp.bfloat16)   # (H*WR, Pp)

    # ---- conv3 (1x1) + bn3 + residual add + relu ----------------------------
    y3 = jnp.dot(y2, w3_ref[...], preferred_element_type=jnp.float32)
    y3 = (y3 + b3_ref[...]).reshape(H, WR, Cp)[:, :W, :]            # (H, W, Cp)
    # Residual is re-read from the (still resident) input block here.
    o_ref[0] = jnp.maximum(y3 + x_ref[0], 0.0).astype(o_ref.dtype)


# ----------------------------------------------------------------------------
# Wrapper
# ----------------------------------------------------------------------------
def bottleneck_pallas(x_nchw, params):
    """x_nchw: (N, Cin, H, W) f32; returns (N, Cin, H, W) f32."""
    w1, w2, w3 = params["w1"], params["w2"], params["w3"]
    b1, b2, b3 = params["b1"], params["b2"], params["b3"]
    cin = params["cin"]

    N, _, H, W = x_nchw.shape
    Cp, Pp = w1.shape                       # padded channel dims
    WR = max(16, _round_up(W + 1, 16))      # row stride of the staging layout

    x = jnp.transpose(x_nchw, (0, 2, 3, 1))                  # NHWC
    if Cp > cin:
        x = jnp.pad(x, ((0, 0), (0, 0), (0, 0), (0, Cp - cin)))

    w2r = w2.reshape(3, 3 * Pp, Pp)         # (dy, dx*in, out) for merged-K dots

    mode = _roll_mode()
    kernel = functools.partial(_bottleneck_kernel, H=H, W=W, WR=WR, mode=mode)

    def _full_spec(arr):
        shape = arr.shape
        return pl.BlockSpec(shape, lambda n: (0,) * len(shape))

    # Rough per-step working set -> explicit scoped-VMEM budget (v5e default is
    # only 16 MiB; keep it <= v7x's 64 MiB physical VMEM).
    r = (H + 2) * WR
    est = (4 * H * W * Cp * 4                              # 2x dbl-buffered io
           + (Cp * Pp + 9 * Pp * Pp + Pp * Cp) * 2         # bf16 weights
           + 3 * r * Pp * 4 + r * 3 * Pp * 2               # staging + rolls
           + 2 * H * WR * Pp * 4 + H * WR * Cp * 4)        # acc / y2 / y3
    vmem_limit = int(min(56 * 2**20, max(32 * 2**20, 2 * est)))

    out_nhwc = pl.pallas_call(
        kernel,
        out_shape=jax.ShapeDtypeStruct((N, H, W, Cp), jnp.float32),
        grid_spec=pltpu.PrefetchScalarGridSpec(
            num_scalar_prefetch=0,
            grid=(N,),
            in_specs=[
                pl.BlockSpec((1, H, W, Cp), lambda n: (n, 0, 0, 0)),   # x
                _full_spec(w1), _full_spec(w2r), _full_spec(w3),
                _full_spec(b1), _full_spec(b2), _full_spec(b3),
            ],
            out_specs=pl.BlockSpec((1, H, W, Cp), lambda n: (n, 0, 0, 0)),
        ),
        compiler_params=pltpu.CompilerParams(
            dimension_semantics=("parallel",),
            vmem_limit_bytes=vmem_limit),
    )(x, w1, w2r, w3, b1, b2, b3)

    return jnp.transpose(out_nhwc[..., :cin], (0, 3, 1, 2))   # -> NCHW


# ----------------------------------------------------------------------------
# Parameters (BN folded) + pure-JAX reference
# ----------------------------------------------------------------------------
def make_params(key, inplanes, planes):
    """Deterministic params; eval-mode BN scale folded into conv weights,
    channel dims zero-padded to multiples of 128, weights cast to bf16."""
    expansion = 4
    outplanes = planes * expansion
    assert inplanes == outplanes, "identity shortcut needs inplanes == 4*planes"
    eps = 1e-5
    ks = jax.random.split(key, 15)

    w1 = jax.random.normal(ks[0], (inplanes, planes), jnp.float32) * 0.1
    w2 = jax.random.normal(ks[1], (3, 3, planes, planes), jnp.float32) * 0.1
    w3 = jax.random.normal(ks[2], (planes, outplanes), jnp.float32) * 0.1

    def bn(kg, kb, km, kv, c):
        gamma = 1.0 + 0.1 * jax.random.normal(kg, (c,), jnp.float32)
        beta = 0.1 * jax.random.normal(kb, (c,), jnp.float32)
        mean = 0.1 * jax.random.normal(km, (c,), jnp.float32)
        var = jax.random.uniform(kv, (c,), jnp.float32, minval=0.5, maxval=1.5)
        scale = gamma / jnp.sqrt(var + eps)
        return scale, beta - mean * scale

    s1, b1 = bn(ks[3], ks[4], ks[5], ks[6], planes)
    s2, b2 = bn(ks[7], ks[8], ks[9], ks[10], planes)
    s3, b3 = bn(ks[11], ks[12], ks[13], ks[14], outplanes)

    # Fold BN scale into output channels (exact: scale precedes the ReLU).
    w1 = w1 * s1[None, :]
    w2 = w2 * s2[None, None, None, :]
    w3 = w3 * s3[None, :]

    # Lane-dense padding of every channel dim.
    Pp = _round_up(planes, 128)
    Cp = _round_up(inplanes, 128)
    w1 = jnp.pad(w1, ((0, Cp - inplanes), (0, Pp - planes)))
    w2 = jnp.pad(w2, ((0, 0), (0, 0), (0, Pp - planes), (0, Pp - planes)))
    w3 = jnp.pad(w3, ((0, Pp - planes), (0, Cp - outplanes)))
    b1 = jnp.pad(b1, (0, Pp - planes)).reshape(1, Pp)
    b2 = jnp.pad(b2, (0, Pp - planes)).reshape(1, Pp)
    b3 = jnp.pad(b3, (0, Cp - outplanes)).reshape(1, Cp)

    return dict(w1=w1.astype(jnp.bfloat16), w2=w2.astype(jnp.bfloat16),
                w3=w3.astype(jnp.bfloat16), b1=b1, b2=b2, b3=b3, cin=inplanes)


def bottleneck_ref(x_nchw, params):
    """XLA-conv reference using the same folded bf16 weights / f32 accumulate."""
    w1, w2, w3 = params["w1"], params["w2"], params["w3"]
    b1, b2, b3 = params["b1"], params["b2"], params["b3"]
    cin = params["cin"]
    Cp = w1.shape[0]
    dn = ("NHWC", "HWIO", "NHWC")
    bf16, f32 = jnp.bfloat16, jnp.float32

    x = jnp.transpose(x_nchw, (0, 2, 3, 1))
    xp = jnp.pad(x, ((0, 0), (0, 0), (0, 0), (0, Cp - cin)))
    y = lax.conv_general_dilated(xp.astype(bf16), w1[None, None], (1, 1),
                                 "VALID", dimension_numbers=dn,
                                 preferred_element_type=f32)
    y = jnp.maximum(y + b1[None, None], 0.0)
    y = lax.conv_general_dilated(y.astype(bf16), w2, (1, 1),
                                 ((1, 1), (1, 1)), dimension_numbers=dn,
                                 preferred_element_type=f32)
    y = jnp.maximum(y + b2[None, None], 0.0)
    y = lax.conv_general_dilated(y.astype(bf16), w3[None, None], (1, 1),
                                 "VALID", dimension_numbers=dn,
                                 preferred_element_type=f32)
    y = jnp.maximum(y + b3[None, None] + xp, 0.0)
    return jnp.transpose(y[..., :cin], (0, 3, 1, 2))


if __name__ == "__main__":
    key = jax.random.PRNGKey(0)
    k_x, k_p = jax.random.split(key)

    N, planes, H, W = 2, 4, 8, 8
    inplanes = planes * 4                    # identity-shortcut configuration

    x = jax.random.normal(k_x, (N, inplanes, H, W), jnp.float32)
    params = make_params(k_p, inplanes, planes)

    out = jax.block_until_ready(bottleneck_pallas(x, params))
    ref = jax.block_until_ready(bottleneck_ref(x, params))

    assert out.shape == (N, inplanes, H, W)
    err = float(jnp.max(jnp.abs(out - ref)))
    assert jnp.allclose(out, ref, atol=2e-3, rtol=2e-3), f"max err {err}"

    print("KERNEL_OK")
</pallas_src>

<mosaic_0001>
module attributes {stable_mosaic.version = 11 : i64} {
  func.func @k(%arg0: memref<160x128xf32, #tpu.memory_space<vmem>>, %arg1: memref<160x128xf32, #tpu.memory_space<vmem>>) attributes {dimension_semantics = [], scalar_prefetch = 0 : i64, scratch_operands = 0 : i64, tpu.core_type = #tpu.core_type<tc>} {
    %c0 = arith.constant 0 : index
    %c0_0 = arith.constant 0 : index
    %0 = vector.load %arg0[%c0, %c0_0] : memref<160x128xf32, #tpu.memory_space<vmem>>, vector<160x128xf32>
    %c1_i32 = arith.constant 1 : i32
    %1 = tpu.dynamic_rotate %0 by %c1_i32 dim 0 : vector<160x128xf32>, i32 -> vector<160x128xf32>
    %c0_1 = arith.constant 0 : index
    %c0_2 = arith.constant 0 : index
    %2 = vector.load %arg1[%c0_1, %c0_2] : memref<160x128xf32, #tpu.memory_space<vmem>>, vector<160x128xf32>
    tpu.vector_store %arg1[%c0_1, %c0_2], %1 {strides = array<i32>} : memref<160x128xf32, #tpu.memory_space<vmem>>, vector<160x128xf32>,
    return
  }
}

module attributes {stable_mosaic.version = 11 : i64} {
  func.func @_bottleneck_kernel(%arg0: i32, %arg1: memref<1x8x8x128xf32, #tpu.memory_space<vmem>>, %arg2: memref<128x128xbf16, #tpu.memory_space<vmem>>, %arg3: memref<3x384x128xbf16, #tpu.memory_space<vmem>>, %arg4: memref<128x128xbf16, #tpu.memory_space<vmem>>, %arg5: memref<1x128xf32, #tpu.memory_space<vmem>>, %arg6: memref<1x128xf32, #tpu.memory_space<vmem>>, %arg7: memref<1x128xf32, #tpu.memory_space<vmem>>, %arg8: memref<1x8x8x128xf32, #tpu.memory_space<vmem>>) attributes {dimension_semantics = [#tpu.dimension_semantics<parallel>], iteration_bounds = array<i64: 2>, scalar_prefetch = 0 : i64, scratch_operands = 0 : i64, tpu.core_type = #tpu.core_type<tc>, window_params = [{transform_indices = @transform_0, window_bounds = array<i64: 1, 8, 8, 128>}, {pipeline_mode = #tpu.pipeline_mode<synchronous>, transform_indices = @transform_1, window_bounds = array<i64: 128, 128>}, {pipeline_mode = #tpu.pipeline_mode<synchronous>, transform_indices = @transform_2, window_bounds = array<i64: 3, 384, 128>}, {pipeline_mode = #tpu.pipeline_mode<synchronous>, transform_indices = @transform_3, window_bounds = array<i64: 128, 128>}, {pipeline_mode = #tpu.pipeline_mode<synchronous>, transform_indices = @transform_4, window_bounds = array<i64: 1, 128>}, {pipeline_mode = #tpu.pipeline_mode<synchronous>, transform_indices = @transform_5, window_bounds = array<i64: 1, 128>}, {pipeline_mode = #tpu.pipeline_mode<synchronous>, transform_indices = @transform_6, window_bounds = array<i64: 1, 128>}, {transform_indices = @transform_7, window_bounds = array<i64: 1, 8, 8, 128>}]} {
    %c0 = arith.constant 0 : index
    %c0_0 = arith.constant 0 : index
    %c0_1 = arith.constant 0 : index
    %c0_2 = arith.constant 0 : index
    %0 = vector.load %arg1[%c0, %c0_0, %c0_1, %c0_2] : memref<1x8x8x128xf32, #tpu.memory_space<vmem>>, vector<1x8x8x128xf32>
    %1 = vector.shape_cast %0 : vector<1x8x8x128xf32> to vector<8x8x128xf32>
    %2 = vector.shape_cast %1 : vector<8x8x128xf32> to vector<64x128xf32>
    %3 = arith.truncf %2 : vector<64x128xf32> to vector<64x128xbf16>
    %c0_3 = arith.constant 0 : index
    %c0_4 = arith.constant 0 : index
    %4 = vector.load %arg2[%c0_3, %c0_4] : memref<128x128xbf16, #tpu.memory_space<vmem>>, vector<128x128xbf16>
    %cst = arith.constant dense<0.000000e+00> : vector<64x128xf32>
    %5 = tpu.matmul %3, %4, %cst {dimension_numbers = #tpu.dot_dimension_numbers<[1], [0], [0], [1], [0, 0, 1, 1], [], []>} : vector<64x128xbf16>, vector<128x128xbf16>, vector<64x128xf32> -> vector<64x128xf32>
    %c0_5 = arith.constant 0 : index
    %c0_6 = arith.constant 0 : index
    %6 = vector.load %arg5[%c0_5, %c0_6] : memref<1x128xf32, #tpu.memory_space<vmem>>, vector<1x128xf32>
    %7 = vector.broadcast %6 : vector<1x128xf32> to vector<64x128xf32>
    %8 = arith.addf %5, %7 : vector<64x128xf32>
    %cst_7 = arith.constant 0.000000e+00 : f32
    %9 = vector.broadcast %cst_7 : f32 to vector<64x128xf32>
    %10 = arith.maximumf %8, %9 : vector<64x128xf32>
    %11 = vector.shape_cast %10 : vector<64x128xf32> to vector<8x8x128xf32>
    %cst_8 = arith.constant 0.000000e+00 : f32
    %12 = vector.broadcast %cst_8 : f32 to vector<8x8x128xf32>
    %13 = tpu.concatenate %11, %12 in 1 : vector<8x8x128xf32>, vector<8x8x128xf32> -> vector<8x16x128xf32>
    %cst_9 = arith.constant 0.000000e+00 : f32
    %14 = vector.broadcast %cst_9 : f32 to vector<1x16x128xf32>
    %15 = tpu.concatenate %14, %13, %14 in 0 : vector<1x16x128xf32>, vector<8x16x128xf32>, vector<1x16x128xf32> -> vector<10x16x128xf32>
    %16 = vector.shape_cast %15 : vector<10x16x128xf32> to vector<160x128xf32>
    %17 = vector.extract_strided_slice %16 {offsets = [159, 0], sizes = [1, 128], strides = [1, 1]} : vector<160x128xf32> to vector<1x128xf32>
    %18 = vector.extract_strided_slice %16 {offsets = [0, 0], sizes = [159, 128], strides = [1, 1]} : vector<160x128xf32> to vector<159x128xf32>
    %19 = tpu.concatenate %17, %18 in 0 : vector<1x128xf32>, vector<159x128xf32> -> vector<160x128xf32>
    %20 = vector.extract_strided_slice %16 {offsets = [1, 0], sizes = [159, 128], strides = [1, 1]} : vector<160x128xf32> to vector<159x128xf32>
    %21 = vector.extract_strided_slice %16 {offsets = [0, 0], sizes = [1, 128], strides = [1, 1]} : vector<160x128xf32> to vector<1x128xf32>
    %22 = tpu.concatenate %20, %21 in 0 : vector<159x128xf32>, vector<1x128xf32> -> vector<160x128xf32>
    %23 = arith.truncf %19 : vector<160x128xf32> to vector<160x128xbf16>
    %24 = arith.truncf %16 : vector<160x128xf32> to vector<160x128xbf16>
    %25 = arith.truncf %22 : vector<160x128xf32> to vector<160x128xbf16>
    %26 = tpu.concatenate %23, %24, %25 in 1 : vector<160x128xbf16>, vector<160x128xbf16>, vector<160x128xbf16> -> vector<160x384xbf16>
    %cst_10 = arith.constant 0.000000e+00 : f32
    %27 = vector.broadcast %cst_10 : f32 to vector<128x128xf32>
    %28 = vector.extract_strided_slice %26 {offsets = [0, 0], sizes = [128, 384], strides = [1, 1]} : vector<160x384xbf16> to vector<128x384xbf16>
    %c0_11 = arith.constant 0 : index
    %c0_12 = arith.constant 0 : index
    %c0_13 = arith.constant 0 : index
    %29 = vector.load %arg3[%c0_11, %c0_12, %c0_13] : memref<3x384x128xbf16, #tpu.memory_space<vmem>>, vector<1x384x128xbf16>
    %30 = vector.shape_cast %29 : vector<1x384x128xbf16> to vector<384x128xbf16>
    %cst_14 = arith.constant dense<0.000000e+00> : vector<128x128xf32>
    %31 = tpu.matmul %28, %30, %cst_14 {dimension_numbers = #tpu.dot_dimension_numbers<[1], [0], [0], [1], [0, 0, 1, 1], [], []>} : vector<128x384xbf16>, vector<384x128xbf16>, vector<128x128xf32> -> vector<128x128xf32>
    %32 = arith.addf %27, %31 : vector<128x128xf32>
    %33 = vector.extract_strided_slice %26 {offsets = [16, 0], sizes = [128, 384], strides = [1, 1]} : vector<160x384xbf16> to vector<128x384xbf16>
    %c1 = arith.constant 1 : index
    %c0_15 = arith.constant 0 : index
    %c0_16 = arith.constant 0 : index
    %34 = vector.load %arg3[%c1, %c0_15, %c0_16] : memref<3x384x128xbf16, #tpu.memory_space<vmem>>, vector<1x384x128xbf16>
    %35 = vector.shape_cast %34 : vector<1x384x128xbf16> to vector<384x128xbf16>
    %cst_17 = arith.constant dense<0.000000e+00> : vector<128x128xf32>
    %36 = tpu.matmul %33, %35, %cst_17 {dimension_numbers = #tpu.dot_dimension_numbers<[1], [0], [0], [1], [0, 0, 1, 1], [], []>} : vector<128x384xbf16>, vector<384x128xbf16>, vector<128x128xf32> -> vector<128x128xf32>
    %37 = arith.addf %32, %36 : vector<128x128xf32>
    %38 = vector.extract_strided_slice %26 {offsets = [32, 0], sizes = [128, 384], strides = [1, 1]} : vector<160x384xbf16> to vector<128x384xbf16>
    %c2 = arith.constant 2 : index
    %c0_18 = arith.constant 0 : index
    %c0_19 = arith.constant 0 : index
    %39 = vector.load %arg3[%c2, %c0_18, %c0_19] : memref<3x384x128xbf16, #tpu.memory_space<vmem>>, vector<1x384x128xbf16>
    %40 = vector.shape_cast %39 : vector<1x384x128xbf16> to vector<384x128xbf16>
    %cst_20 = arith.constant dense<0.000000e+00> : vector<128x128xf32>
    %41 = tpu.matmul %38, %40, %cst_20 {dimension_numbers = #tpu.dot_dimension_numbers<[1], [0], [0], [1], [0, 0, 1, 1], [], []>} : vector<128x384xbf16>, vector<384x128xbf16>, vector<128x128xf32> -> vector<128x128xf32>
    %42 = arith.addf %37, %41 : vector<128x128xf32>
    %c0_21 = arith.constant 0 : index
    %c0_22 = arith.constant 0 : index
    %43 = vector.load %arg6[%c0_21, %c0_22] : memref<1x128xf32, #tpu.memory_space<vmem>>, vector<1x128xf32>
    %44 = vector.broadcast %43 : vector<1x128xf32> to vector<128x128xf32>
    %45 = arith.addf %42, %44 : vector<128x128xf32>
    %cst_23 = arith.constant 0.000000e+00 : f32
    %46 = vector.broadcast %cst_23 : f32 to vector<128x128xf32>
    %47 = arith.maximumf %45, %46 : vector<128x128xf32>
    %48 = arith.truncf %47 : vector<128x128xf32> to vector<128x128xbf16>
    %c0_24 = arith.constant 0 : index
    %c0_25 = arith.constant 0 : index
    %49 = vector.load %arg4[%c0_24, %c0_25] : memref<128x128xbf16, #tpu.memory_space<vmem>>, vector<128x128xbf16>
    %cst_26 = arith.constant dense<0.000000e+00> : vector<128x128xf32>
    %50 = tpu.matmul %48, %49, %cst_26 {dimension_numbers = #tpu.dot_dimension_numbers<[1], [0], [0], [1], [0, 0, 1, 1], [], []>} : vector<128x128xbf16>, vector<128x128xbf16>, vector<128x128xf32> -> vector<128x128xf32>
    %c0_27 = arith.constant 0 : index
    %c0_28 = arith.constant 0 : index
    %51 = vector.load %arg7[%c0_27, %c0_28] : memref<1x128xf32, #tpu.memory_space<vmem>>, vector<1x128xf32>
    %52 = vector.broadcast %51 : vector<1x128xf32> to vector<128x128xf32>
    %53 = arith.addf %50, %52 : vector<128x128xf32>
    %54 = vector.shape_cast %53 : vector<128x128xf32> to vector<8x16x128xf32>
    %55 = vector.extract_strided_slice %54 {offsets = [0, 0, 0], sizes = [8, 8, 128], strides = [1, 1, 1]} : vector<8x16x128xf32> to vector<8x8x128xf32>
    %c0_29 = arith.constant 0 : index
    %c0_30 = arith.constant 0 : index
    %c0_31 = arith.constant 0 : index
    %c0_32 = arith.constant 0 : index
    %56 = vector.load %arg1[%c0_29, %c0_30, %c0_31, %c0_32] : memref<1x8x8x128xf32, #tpu.memory_space<vmem>>, vector<1x8x8x128xf32>
    %57 = vector.shape_cast %56 : vector<1x8x8x128xf32> to vector<8x8x128xf32>
    %58 = arith.addf %55, %57 : vector<8x8x128xf32>
    %cst_33 = arith.constant 0.000000e+00 : f32
    %59 = vector.broadcast %cst_33 : f32 to vector<8x8x128xf32>
    %60 = arith.maximumf %58, %59 : vector<8x8x128xf32>
    %c0_34 = arith.constant 0 : index
    %c0_35 = arith.constant 0 : index
    %c0_36 = arith.constant 0 : index
    %c0_37 = arith.constant 0 : index
    %61 = vector.load %arg8[%c0_34, %c0_35, %c0_36, %c0_37] : memref<1x8x8x128xf32, #tpu.memory_space<vmem>>, vector<1x8x8x128xf32>
    %62 = vector.shape_cast %61 : vector<1x8x8x128xf32> to vector<8x8x128xf32>
    %63 = vector.shape_cast %60 : vector<8x8x128xf32> to vector<1x8x8x128xf32>
    tpu.vector_store %arg8[%c0_34, %c0_35, %c0_36, %c0_37], %63 {strides = array<i32>} : memref<1x8x8x128xf32, #tpu.memory_space<vmem>>, vector<1x8x8x128xf32>,
    return
  }
  func.func @transform_0(%arg0: i32) -> (i32, i32, i32, i32) {
    %c0_i32 = arith.constant 0 : i32
    %c0_i32_0 = arith.constant 0 : i32
    %c0_i32_1 = arith.constant 0 : i32
    %c0_i32_2 = arith.constant 0 : i32
    return %arg0, %c0_i32, %c0_i32_0, %c0_i32_1 : i32, i32, i32, i32
  }
  func.func @transform_1(%arg0: i32) -> (i32, i32) {
    %c0_i32 = arith.constant 0 : i32
    %c0_i32_0 = arith.constant 0 : i32
    %c0_i32_1 = arith.constant 0 : i32
    return %c0_i32, %c0_i32_0 : i32, i32
  }
  func.func @transform_2(%arg0: i32) -> (i32, i32, i32) {
    %c0_i32 = arith.constant 0 : i32
    %c0_i32_0 = arith.constant 0 : i32
    %c0_i32_1 = arith.constant 0 : i32
    %c0_i32_2 = arith.constant 0 : i32
    return %c0_i32, %c0_i32_0, %c0_i32_1 : i32, i32, i32
  }
  func.func @transform_3(%arg0: i32) -> (i32, i32) {
    %c0_i32 = arith.constant 0 : i32
    %c0_i32_0 = arith.constant 0 : i32
    %c0_i32_1 = arith.constant 0 : i32
    return %c0_i32, %c0_i32_0 : i32, i32
  }
  func.func @transform_4(%arg0: i32) -> (i32, i32) {
    %c0_i32 = arith.constant 0 : i32
    %c0_i32_0 = arith.constant 0 : i32
    %c0_i32_1 = arith.constant 0 : i32
    return %c0_i32, %c0_i32_0 : i32, i32
  }
  func.func @transform_5(%arg0: i32) -> (i32, i32) {
    %c0_i32 = arith.constant 0 : i32
    %c0_i32_0 = arith.constant 0 : i32
    %c0_i32_1 = arith.constant 0 : i32
    return %c0_i32, %c0_i32_0 : i32, i32
  }
  func.func @transform_6(%arg0: i32) -> (i32, i32) {
    %c0_i32 = arith.constant 0 : i32
    %c0_i32_0 = arith.constant 0 : i32
    %c0_i32_1 = arith.constant 0 : i32
    return %c0_i32, %c0_i32_0 : i32, i32
  }
  func.func @transform_7(%arg0: i32) -> (i32, i32, i32, i32) {
    %c0_i32 = arith.constant 0 : i32
    %c0_i32_0 = arith.constant 0 : i32
    %c0_i32_1 = arith.constant 0 : i32
    %c0_i32_2 = arith.constant 0 : i32
    return %arg0, %c0_i32, %c0_i32_0, %c0_i32_1 : i32, i32, i32, i32
  }
}

</mosaic_0001>

<llo_original>
// kernel: tpu_custom_call.1
$region0: #{tpu_custom_call.1}
  #allocation0 [shape = 'u32[]', space=smem, size = 0x4, offset = 0x4, fixed_abs, tag = 'smem constant byte address 0x4 - core index']
  #allocation1 [shape = 'u32[144,128]{1,0:T(1,128)}', space=vmem, size = 0x12000, scoped, tag = 'internal scratch']
  %s0 = inlined_call_operand.hbm [shape: f32[160,128], index: 0, kind: input, shape index: {}]
  %s1 = inlined_call_operand.hbm [shape: f32[160,128], index: 1, kind: output, shape index: {}]
  %s2 = sld [smem:[#allocation0]]
  $region18: #{tpu_custom_call.1} parent=0
    _
  %s4 = ssub.s32 1, %s2
  %s5 = scalar_select 0, %s4, %s2
  $region1: #{tpu_custom_call.1} parent=0
    #allocation2 [shape = 'u8[81920]{0}', space=vmem, size = 0x14000, scoped, tag = 'input window, operand 0, single buffered']
    #allocation3 [shape = 's32[1]{0}', space=sflag, size = 0x4, scoped, tag = 'scoped memory for tpu_custom_call.1']
    #allocation4 [shape = 's32[1]{0}', space=sflag, size = 0x4, scoped, tag = 'scoped memory for tpu_custom_call.1']
    #allocation5 [shape = 'u8[81920]{0}', space=vmem, size = 0x14000, scoped, tag = 'output window, operand 0, single buffered']
    %6 = vsyncpa [#allocation3], 0
    %7 = vsyncpa [#allocation4], 0
    // Predicated region
    $region2: #{tpu_custom_call.1} parent=1 // pred_check
      _
    $region3: #{tpu_custom_call.1} parent=1 // pred_check_branch
      %9 = sbr.rel (0) target = $region5
    $region4: #{tpu_custom_call.1} parent=1 // pred_region
      %s11 = ssub.s32 2560, 2560
      %12 = vsyncadd [#allocation3], %s11
      %s13 = sshll.u32 [#allocation2], 4
      %s14 = int_to_ptr.vmem [resolvable:$true] %s13
      %19 = dma.hbm_to_vmem [thread:$0]  %s0, 2560, %s14, [#allocation3], 128, 128, 8
    $region5: #{tpu_custom_call.1} parent=1 // pred_fallthru
      _
    // Predicated region
    $region6: #{tpu_custom_call.1} parent=1 // pred_check
      _
    $region7: #{tpu_custom_call.1} parent=1 // pred_check_branch
      %21 = sbr.rel (0) target = $region9
    $region8: #{tpu_custom_call.1} parent=1 // pred_region
      %22 = dma.done [#allocation3], 2560
    $region9: #{tpu_custom_call.1} parent=1 // pred_fallthru
      _
    %v23 = vld [vmem:[#allocation2] sm:$0xff]
    %v24 = vld [vmem:[#allocation2 + $0x8] sm:$0xff]
    %v25 = vld [vmem:[#allocation2 + $0x10] sm:$0xff]
    %v26 = vld [vmem:[#allocation2 + $0x18] sm:$0xff]
    %v27 = vld [vmem:[#allocation2 + $0x20] sm:$0xff]
    %v28 = vld [vmem:[#allocation2 + $0x28] sm:$0xff]
    %v29 = vld [vmem:[#allocation2 + $0x30] sm:$0xff]
    %v30 = vld [vmem:[#allocation2 + $0x38] sm:$0xff]
    %v31 = vld [vmem:[#allocation2 + $0x40] sm:$0xff]
    %v32 = vld [vmem:[#allocation2 + $0x48] sm:$0xff]
    %v33 = vld [vmem:[#allocation2 + $0x50] sm:$0xff]
    %v34 = vld [vmem:[#allocation2 + $0x58] sm:$0xff]
    %v35 = vld [vmem:[#allocation2 + $0x60] sm:$0xff]
    %v36 = vld [vmem:[#allocation2 + $0x68] sm:$0xff]
    %v37 = vld [vmem:[#allocation2 + $0x70] sm:$0xff]
    %v38 = vld [vmem:[#allocation2 + $0x78] sm:$0xff]
    %v39 = vld [vmem:[#allocation2 + $0x80] sm:$0xff]
    %v40 = vld [vmem:[#allocation2 + $0x88] sm:$0xff]
    %v41 = vld [vmem:[#allocation2 + $0x90] sm:$0xff]
    %v42 = vld [vmem:[#allocation2 + $0x98] sm:$0xff]
    %v43 = vrot.slane %v23, 7
    %v44 = vrot.slane %v24, 7
    %v45 = vrot.slane %v25, 7
    %v46 = vrot.slane %v26, 7
    %v47 = vrot.slane %v27, 7
    %v48 = vrot.slane %v28, 7
    %v49 = vrot.slane %v29, 7
    %v50 = vrot.slane %v30, 7
    %v51 = vrot.slane %v31, 7
    %v52 = vrot.slane %v32, 7
    %v53 = vrot.slane %v33, 7
    %v54 = vrot.slane %v34, 7
    %v55 = vrot.slane %v35, 7
    %v56 = vrot.slane %v36, 7
    %v57 = vrot.slane %v37, 7
    %v58 = vrot.slane %v38, 7
    %v59 = vrot.slane %v39, 7
    %v60 = vrot.slane %v40, 7
    %v61 = vrot.slane %v41, 7
    %v62 = vrot.slane %v42, 7
    %v63 = vlaneseq
    %v64 = vshrl.u32 %v63, 7
    %vm65 = vcmp.lt.s32.totalorder %v64, 1
    %v66 = vsel %vm65, %v61, %v62
    %v67 = vsel %vm65, %v60, %v61
    %v68 = vsel %vm65, %v59, %v60
    %v69 = vsel %vm65, %v58, %v59
    %v70 = vsel %vm65, %v57, %v58
    %v71 = vsel %vm65, %v56, %v57
    %v72 = vsel %vm65, %v55, %v56
    %v73 = vsel %vm65, %v54, %v55
    %v74 = vsel %vm65, %v53, %v54
    %v75 = vsel %vm65, %v52, %v53
    %v76 = vsel %vm65, %v51, %v52
    %v77 = vsel %vm65, %v50, %v51
    %v78 = vsel %vm65, %v49, %v50
    %v79 = vsel %vm65, %v48, %v49
    %v80 = vsel %vm65, %v47, %v48
    %v81 = vsel %vm65, %v46, %v47
    %v82 = vsel %vm65, %v45, %v46
    %v83 = vsel %vm65, %v44, %v45
    %v84 = vsel %vm65, %v43, %v44
    %v85 = vsel %vm65, %v62, %v43
    %86 = vst [vmem:[#allocation5] sm:$0xff] %v85
    %87 = vst [vmem:[#allocation5 + $0x8] sm:$0xff] %v84
    %88 = vst [vmem:[#allocation5 + $0x10] sm:$0xff] %v83
    %89 = vst [vmem:[#allocation5 + $0x18] sm:$0xff] %v82
    %90 = vst [vmem:[#allocation5 + $0x20] sm:$0xff] %v81
    %91 = vst [vmem:[#allocation5 + $0x28] sm:$0xff] %v80
    %92 = vst [vmem:[#allocation5 + $0x30] sm:$0xff] %v79
    %93 = vst [vmem:[#allocation5 + $0x38] sm:$0xff] %v78
    %94 = vst [vmem:[#allocation5 + $0x40] sm:$0xff] %v77
    %95 = vst [vmem:[#allocation5 + $0x48] sm:$0xff] %v76
    %96 = vst [vmem:[#allocation5 + $0x50] sm:$0xff] %v75
    %97 = vst [vmem:[#allocation5 + $0x58] sm:$0xff] %v74
    %98 = vst [vmem:[#allocation5 + $0x60] sm:$0xff] %v73
    %99 = vst [vmem:[#allocation5 + $0x68] sm:$0xff] %v72
    %100 = vst [vmem:[#allocation5 + $0x70] sm:$0xff] %v71
    %101 = vst [vmem:[#allocation5 + $0x78] sm:$0xff] %v70
    %102 = vst [vmem:[#allocation5 + $0x80] sm:$0xff] %v69
    %103 = vst [vmem:[#allocation5 + $0x88] sm:$0xff] %v68
    %104 = vst [vmem:[#allocation5 + $0x90] sm:$0xff] %v67
    %105 = vst [vmem:[#allocation5 + $0x98] sm:$0xff] %v66
    // Predicated region
    $region10: #{tpu_custom_call.1} parent=1 // pred_check
      _
    $region11: #{tpu_custom_call.1} parent=1 // pred_check_branch
      %107 = sbr.rel (0) target = $region13
    $region12: #{tpu_custom_call.1} parent=1 // pred_region
      %s109 = ssub.s32 2560, 2560
      %110 = vsyncadd [#allocation4], %s109
      %s111 = sshll.u32 [#allocation5], 4
      %s112 = int_to_ptr.vmem [resolvable:$true] %s111
      %117 = dma.vmem_to_hbm [thread:$0]  %s112, 2560, %s1, [#allocation4], 128, 128, 8
    $region13: #{tpu_custom_call.1} parent=1 // pred_fallthru
      _
    // Predicated region
    $region14: #{tpu_custom_call.1} parent=1 // pred_check
      _
    $region15: #{tpu_custom_call.1} parent=1 // pred_check_branch
      %119 = sbr.rel (0) target = $region17
    $region16: #{tpu_custom_call.1} parent=1 // pred_region
      %120 = dma.done [#allocation4], 2560
    $region17: #{tpu_custom_call.1} parent=1 // pred_fallthru
      _
    %121 = vsyncpa [#allocation3], 1
    %122 = vsyncpa [#allocation4], 1

// kernel: tpu_custom_call.1
$region0: #{tpu_custom_call.1}
  #allocation0 [shape = 'u32[]', space=smem, size = 0x4, offset = 0x4, fixed_abs, tag = 'smem constant byte address 0x4 - core index']
  #allocation1 [shape = 'u32[144,128]{1,0:T(1,128)}', space=vmem, size = 0x12000, scoped, tag = 'internal scratch']
  %s0 = inlined_call_operand.hbm [shape: f32[2,8,8,128], index: 0, kind: input, shape index: {}]
  %s1 = inlined_call_operand.hbm [shape: bf16[128,128], index: 1, kind: input, shape index: {}]
  %s2 = inlined_call_operand.hbm [shape: bf16[3,384,128], index: 2, kind: input, shape index: {}]
  %s3 = inlined_call_operand.hbm [shape: bf16[128,128], index: 3, kind: input, shape index: {}]
  %s4 = inlined_call_operand.vmem [shape: f32[1,128], index: 4, kind: input, shape index: {}]
  %s5 = inlined_call_operand.vmem [shape: f32[1,128], index: 5, kind: input, shape index: {}]
  %s6 = inlined_call_operand.vmem [shape: f32[1,128], index: 6, kind: input, shape index: {}]
  %s7 = inlined_call_operand.hbm [shape: f32[2,8,8,128], index: 7, kind: output, shape index: {}]
  %s8 = sld [smem:[#allocation0]]
  $region77: #{tpu_custom_call.1} parent=0
    _
  %s10 = ssub.s32 1, %s8
  %s11 = scalar_select 0, %s10, %s8
  $region1: #{tpu_custom_call.1} parent=0
    #allocation2 [shape = 'u8[65536]{0}', space=vmem, size = 0x10000, scoped, tag = 'input window, operand 0']
    #allocation3 [shape = 's32[2]{0}', space=sflag, size = 0x8, scoped, tag = 'scoped memory for tpu_custom_call.1']
    #allocation4 [shape = 's32[2]{0}', space=sflag, size = 0x8, scoped, tag = 'scoped memory for tpu_custom_call.1']
    #allocation5 [shape = 'u8[32768]{0}', space=vmem, size = 0x8000, scoped, tag = 'input window, operand 1, single buffered']
    #allocation6 [shape = 's32[1]{0}', space=sflag, size = 0x4, scoped, tag = 'scoped memory for tpu_custom_call.1']
    #allocation7 [shape = 'u8[294912]{0}', space=vmem, size = 0x48000, scoped, tag = 'input window, operand 2, single buffered']
    #allocation8 [shape = 'u8[32768]{0}', space=vmem, size = 0x8000, scoped, tag = 'input window, operand 3, single buffered']
    #allocation9 [shape = 's32[1]{0}', space=sflag, size = 0x4, scoped, tag = 'scoped memory for tpu_custom_call.1']
    #allocation10 [shape = 'u8[65536]{0}', space=vmem, size = 0x10000, scoped, tag = 'output window, operand 0']
    %12 = vsyncpa [#allocation3], 0
    %s13 = scalar_lea.sflag [#allocation3], 1
    %14 = vsyncpa %s13, 0
    %15 = vsyncpa [#allocation6], 0
    %16 = vsyncpa [#allocation9], 0
    %17 = vsyncpa [#allocation4], 0
    %s18 = scalar_lea.sflag [#allocation4], 1
    %19 = vsyncpa %s18, 0
    loop: start=0, step=1, limit=4
    $region2: #{tpu_custom_call.1} parent=1 // loop_pre_header
      _
    $region3: #{tpu_custom_call.1} parent=1 // loop_header
      %s21 = sphi 0, %s25
      %p22 = scmp.ge.s32.totalorder %s21, 4
      %s31 = sphi 0, %s33
      %s34 = sphi 0, %s31
      %s35 = sphi 0, %s34
      %s51 = sphi 0, %s35
      %s55 = sphi 0, %s55
      %s57 = sphi 0, %s55
      %s58 = sphi 0, %s57
      %s72 = sphi 0, %s58
      %s76 = sphi 0, %s76
      %s78 = sphi 0, %s76
      %s79 = sphi 0, %s78
      %s93 = sphi 0, %s79
      %s97 = sphi 0, %s97
      %s99 = sphi 0, %s97
      %s100 = sphi 0, %s99
      %s114 = sphi 0, %s100
      %s118 = sphi 0, %s118
      %s120 = sphi 0, %s118
      %s121 = sphi 0, %s120
      %s135 = sphi 0, %s121
      %s139 = sphi 0, %s139
      %s141 = sphi 0, %s139
      %s142 = sphi 0, %s141
      %s156 = sphi 0, %s142
      %s160 = sphi 0, %s160
      %s162 = sphi 0, %s160
      %s163 = sphi 0, %s162
      %s177 = sphi 0, %s163
      %s183 = sphi 0, %s185
      %s186 = sphi 0, %s183
      %s187 = sphi 0, %s186
      %s203 = sphi 0, %s187
    $region4: #{tpu_custom_call.1} parent=1 // loop_header_branch
      %24 = sbr.rel (%p22) target = $region8
    $region5: #{tpu_custom_call.1} parent=1 // loop_body
      %s26 = ssub.s32 %s21, 1
      %s27 = ssub.s32 %s21, 2
      %s28 = sadd.s32 %s21, 1
      %s29 = ssub.s32 %s21, %s28
      %p30 = scmp.eq.s32.totalorder %s29, 0
      %s32 = sadd.s32 %s31, 1
      %s33 = scalar_select %p30, %s31, %s32
      %p36 = pneg %p30
      %p37 = scmp.eq.s32.totalorder %s21, 1
      %p38 = por %p36, %p37
      %p39 = scmp.ne.s32.totalorder %s31, %s34
      %p40 = scmp.eq.s32.totalorder %s21, 0
      %p41 = por %p39, %p40
      %p42 = scmp.ne.s32.totalorder %s31, %s34
      %p43 = scmp.eq.s32.totalorder %s26, 1
      %p44 = por %p42, %p43
      %p45 = scmp.ne.s32.totalorder %s34, %s35
      %p46 = scmp.eq.s32.totalorder %s26, 0
      %p47 = por %p45, %p46
      %p48 = scmp.ne.s32.totalorder %s34, %s35
      %p49 = scmp.eq.s32.totalorder %s27, 1
      %p50 = por %p48, %p49
      %p52 = scmp.ne.s32.totalorder %s35, %s51
      %p53 = scmp.eq.s32.totalorder %s27, 0
      %p54 = por %p52, %p53
      %s56 = sadd.s32 %s55, 1
      %p59 = scmp.eq.s32.totalorder %s21, 1
      %p60 = scmp.ne.s32.totalorder %s55, %s57
      %p61 = scmp.eq.s32.totalorder %s21, 0
      %p62 = por %p60, %p61
      %p63 = scmp.ne.s32.totalorder %s55, %s57
      %p64 = scmp.eq.s32.totalorder %s26, 1
      %p65 = por %p63, %p64
      %p66 = scmp.ne.s32.totalorder %s57, %s58
      %p67 = scmp.eq.s32.totalorder %s26, 0
      %p68 = por %p66, %p67
      %p69 = scmp.ne.s32.totalorder %s57, %s58
      %p70 = scmp.eq.s32.totalorder %s27, 1
      %p71 = por %p69, %p70
      %p73 = scmp.ne.s32.totalorder %s58, %s72
      %p74 = scmp.eq.s32.totalorder %s27, 0
      %p75 = por %p73, %p74
      %s77 = sadd.s32 %s76, 1
      %p80 = scmp.eq.s32.totalorder %s21, 1
      %p81 = scmp.ne.s32.totalorder %s76, %s78
      %p82 = scmp.eq.s32.totalorder %s21, 0
      %p83 = por %p81, %p82
      %p84 = scmp.ne.s32.totalorder %s76, %s78
      %p85 = scmp.eq.s32.totalorder %s26, 1
      %p86 = por %p84, %p85
      %p87 = scmp.ne.s32.totalorder %s78, %s79
      %p88 = scmp.eq.s32.totalorder %s26, 0
      %p89 = por %p87, %p88
      %p90 = scmp.ne.s32.totalorder %s78, %s79
      %p91 = scmp.eq.s32.totalorder %s27, 1
      %p92 = por %p90, %p91
      %p94 = scmp.ne.s32.totalorder %s79, %s93
      %p95 = scmp.eq.s32.totalorder %s27, 0
      %p96 = por %p94, %p95
      %s98 = sadd.s32 %s97, 1
      %p101 = scmp.eq.s32.totalorder %s21, 1
      %p102 = scmp.ne.s32.totalorder %s97, %s99
      %p103 = scmp.eq.s32.totalorder %s21, 0
      %p104 = por %p102, %p103
      %p105 = scmp.ne.s32.totalorder %s97, %s99
      %p106 = scmp.eq.s32.totalorder %s26, 1
      %p107 = por %p105, %p106
      %p108 = scmp.ne.s32.totalorder %s99, %s100
      %p109 = scmp.eq.s32.totalorder %s26, 0
      %p110 = por %p108, %p109
      %p111 = scmp.ne.s32.totalorder %s99, %s100
      %p112 = scmp.eq.s32.totalorder %s27, 1
      %p113 = por %p111, %p112
      %p115 = scmp.ne.s32.totalorder %s100, %s114
      %p116 = scmp.eq.s32.totalorder %s27, 0
      %p117 = por %p115, %p116
      %s119 = sadd.s32 %s118, 1
      %p122 = scmp.eq.s32.totalorder %s21, 1
      %p123 = scmp.ne.s32.totalorder %s118, %s120
      %p124 = scmp.eq.s32.totalorder %s21, 0
      %p125 = por %p123, %p124
      %p126 = scmp.ne.s32.totalorder %s118, %s120
      %p127 = scmp.eq.s32.totalorder %s26, 1
      %p128 = por %p126, %p127
      %p129 = scmp.ne.s32.totalorder %s120, %s121
      %p130 = scmp.eq.s32.totalorder %s26, 0
      %p131 = por %p129, %p130
      %p132 = scmp.ne.s32.totalorder %s120, %s121
      %p133 = scmp.eq.s32.totalorder %s27, 1
      %p134 = por %p132, %p133
      %p136 = scmp.ne.s32.totalorder %s121, %s135
      %p137 = scmp.eq.s32.totalorder %s27, 0
      %p138 = por %p136, %p137
      %s140 = sadd.s32 %s139, 1
      %p143 = scmp.eq.s32.totalorder %s21, 1
      %p144 = scmp.ne.s32.totalorder %s139, %s141
      %p145 = scmp.eq.s32.totalorder %s21, 0
      %p146 = por %p144, %p145
      %p147 = scmp.ne.s32.totalorder %s139, %s141
      %p148 = scmp.eq.s32.totalorder %s26, 1
      %p149 = por %p147, %p148
      %p150 = scmp.ne.s32.totalorder %s141, %s142
      %p151 = scmp.eq.s32.totalorder %s26, 0
      %p152 = por %p150, %p151
      %p153 = scmp.ne.s32.totalorder %s141, %s142
      %p154 = scmp.eq.s32.totalorder %s27, 1
      %p155 = por %p153, %p154
      %p157 = scmp.ne.s32.totalorder %s142, %s156
      %p158 = scmp.eq.s32.totalorder %s27, 0
      %p159 = por %p157, %p158
      %s161 = sadd.s32 %s160, 1
      %p164 = scmp.eq.s32.totalorder %s21, 1
      %p165 = scmp.ne.s32.totalorder %s160, %s162
      %p166 = scmp.eq.s32.totalorder %s21, 0
      %p167 = por %p165, %p166
      %p168 = scmp.ne.s32.totalorder %s160, %s162
      %p169 = scmp.eq.s32.totalorder %s26, 1
      %p170 = por %p168, %p169
      %p171 = scmp.ne.s32.totalorder %s162, %s163
      %p172 = scmp.eq.s32.totalorder %s26, 0
      %p173 = por %p171, %p172
      %p174 = scmp.ne.s32.totalorder %s162, %s163
      %p175 = scmp.eq.s32.totalorder %s27, 1
      %p176 = por %p174, %p175
      %p178 = scmp.ne.s32.totalorder %s163, %s177
      %p179 = scmp.eq.s32.totalorder %s27, 0
      %p180 = por %p178, %p179
      %s181 = ssub.s32 %s21, %s28
      %p182 = scmp.eq.s32.totalorder %s181, 0
      %s184 = sadd.s32 %s183, 1
      %s185 = scalar_select %p182, %s183, %s184
      %p188 = pneg %p182
      %p189 = scmp.eq.s32.totalorder %s21, 1
      %p190 = por %p188, %p189
      %p191 = scmp.ne.s32.totalorder %s183, %s186
      %p192 = scmp.eq.s32.totalorder %s21, 0
      %p193 = por %p191, %p192
      %p194 = scmp.ne.s32.totalorder %s183, %s186
      %p195 = scmp.eq.s32.totalorder %s26, 1
      %p196 = por %p194, %p195
      %p197 = scmp.ne.s32.totalorder %s186, %s187
      %p198 = scmp.eq.s32.totalorder %s26, 0
      %p199 = por %p197, %p198
      %p200 = scmp.ne.s32.totalorder %s186, %s187
      %p201 = scmp.eq.s32.totalorder %s27, 1
      %p202 = por %p200, %p201
      %p204 = scmp.ne.s32.totalorder %s187, %s203
      %p205 = scmp.eq.s32.totalorder %s27, 0
      %p206 = por %p204, %p205
      %p207 = scmp.le.s32.totalorder 1, %s21
      %p208 = scmp.lt.s32.totalorder %s21, 3
      %p209 = pnand %p207, %p208
      %p210 = pneg %p209
      // Predicated region
      $region9: #{tpu_custom_call.1} parent=5 // pred_check
        _
      $region10: #{tpu_custom_call.1} parent=5 // pred_check_branch
        %212 = sbr.rel (%p209) target = $region12
      $region11: #{tpu_custom_call.1} parent=5 // pred_region
        %s213 = ssub.s32 %s21, 1
        // Predicated region
        $region13: #{tpu_custom_call.1} parent=11 // pred_check
          %p214 = pneg %p68
        $region14: #{tpu_custom_call.1} parent=11 // pred_check_branch
          %216 = sbr.rel (%p214) target = $region16
        $region15: #{tpu_custom_call.1} parent=11 // pred_region
          %s218 = ssub.s32 1024, 1024
          %219 = vsyncadd [#allocation6], %s218
          %s220 = sshll.u32 [#allocation5], 4
          %s221 = int_to_ptr.vmem [resolvable:$true] %s220
          %226 = dma.hbm_to_vmem [thread:$0]  %s1, 1024, %s221, [#allocation6], 64, 64, 4
        $region16: #{tpu_custom_call.1} parent=11 // pred_fallthru
          _
        // Predicated region
        $region17: #{tpu_custom_call.1} parent=11 // pred_check
          %p227 = pneg %p89
        $region18: #{tpu_custom_call.1} parent=11 // pred_check_branch
          %229 = sbr.rel (%p227) target = $region20
        $region19: #{tpu_custom_call.1} parent=11 // pred_region
          %s231 = ssub.s32 9216, 9216
          %232 = vsyncadd [#allocation6], %s231
          %s233 = sshll.u32 [#allocation7], 4
          %s234 = int_to_ptr.vmem [resolvable:$true] %s233
          %239 = dma.hbm_to_vmem [thread:$0]  %s2, 9216, %s234, [#allocation6], 64, 64, 4
        $region20: #{tpu_custom_call.1} parent=11 // pred_fallthru
          _
        // Predicated region
        $region21: #{tpu_custom_call.1} parent=11 // pred_check
          %p240 = pneg %p110
        $region22: #{tpu_custom_call.1} parent=11 // pred_check_branch
          %242 = sbr.rel (%p240) target = $region24
        $region23: #{tpu_custom_call.1} parent=11 // pred_region
          %s244 = ssub.s32 1024, 1024
          %245 = vsyncadd [#allocation9], %s244
          %s246 = sshll.u32 [#allocation8], 4
          %s247 = int_to_ptr.vmem [resolvable:$true] %s246
          %252 = dma.hbm_to_vmem [thread:$0]  %s3, 1024, %s247, [#allocation9], 64, 64, 4
        $region24: #{tpu_custom_call.1} parent=11 // pred_fallthru
          _
        // Predicated region
        $region25: #{tpu_custom_call.1} parent=11 // pred_check
          %p253 = pneg %p131
        $region26: #{tpu_custom_call.1} parent=11 // pred_check_branch
          %255 = sbr.rel (%p253) target = $region28
        $region27: #{tpu_custom_call.1} parent=11 // pred_region
          _
        $region28: #{tpu_custom_call.1} parent=11 // pred_fallthru
          _
        // Predicated region
        $region29: #{tpu_custom_call.1} parent=11 // pred_check
          %p256 = pneg %p152
        $region30: #{tpu_custom_call.1} parent=11 // pred_check_branch
          %258 = sbr.rel (%p256) target = $region32
        $region31: #{tpu_custom_call.1} parent=11 // pred_region
          _
        $region32: #{tpu_custom_call.1} parent=11 // pred_fallthru
          _
        // Predicated region
        $region33: #{tpu_custom_call.1} parent=11 // pred_check
          %p259 = pneg %p173
        $region34: #{tpu_custom_call.1} parent=11 // pred_check_branch
          %261 = sbr.rel (%p259) target = $region36
        $region35: #{tpu_custom_call.1} parent=11 // pred_region
          _
        $region36: #{tpu_custom_call.1} parent=11 // pred_fallthru
          _
      $region12: #{tpu_custom_call.1} parent=5 // pred_fallthru
        _
      %p262 = scmp.lt.s32.totalorder %s21, 2
      // Predicated region
      $region37: #{tpu_custom_call.1} parent=5 // pred_check
        %p263 = pneg %p262
      $region38: #{tpu_custom_call.1} parent=5 // pred_check_branch
        %265 = sbr.rel (%p263) target = $region40
      $region39: #{tpu_custom_call.1} parent=5 // pred_region
        // Predicated region
        $region41: #{tpu_custom_call.1} parent=39 // pred_check
          %p266 = pneg %p41
        $region42: #{tpu_custom_call.1} parent=39 // pred_check_branch
          %268 = sbr.rel (%p266) target = $region44
        $region43: #{tpu_custom_call.1} parent=39 // pred_region
          %s269 = sand.u32 %s31, 1
          %s270 = scalar_lea.sflag [#allocation3], %s269
          %s271 = sand.u32 %s31, 1
          %s272 = smul.addr %s271, 64
          %s273 = scalar_lea.vmem [#allocation2], %s272
          %s275 = ssub.s32 1024, 1024
          %276 = vsyncadd %s270, %s275
          %s277 = smul.addr %s21, 8
          %s278 = smul.addr %s277, 128
          %s279 = scalar_lea.hbm %s0, %s278
          %s280 = sshll.u32 %s273, 4
          %s281 = int_to_ptr.vmem [resolvable:$true] %s280
          %286 = dma.hbm_to_vmem [thread:$0]  %s279, 1024, %s281, %s270, 128, 128, 8
        $region44: #{tpu_custom_call.1} parent=39 // pred_fallthru
          _
      $region40: #{tpu_custom_call.1} parent=5 // pred_fallthru
        _
      %p287 = scmp.le.s32.totalorder 1, %s21
      %p288 = scmp.lt.s32.totalorder %s21, 3
      %p289 = pnand %p287, %p288
      %p290 = pneg %p289
      // Predicated region
      $region45: #{tpu_custom_call.1} parent=5 // pred_check
        _
      $region46: #{tpu_custom_call.1} parent=5 // pred_check_branch
        %292 = sbr.rel (%p289) target = $region48
      $region47: #{tpu_custom_call.1} parent=5 // pred_region
        %s293 = ssub.s32 %s21, 1
        %s294 = sand.u32 %s34, 1
        %s295 = scalar_lea.sflag [#allocation3], %s294
        %s296 = sand.u32 %s34, 1
        %s297 = smul.addr %s296, 64
        %s298 = scalar_lea.vmem [#allocation2], %s297
        // Predicated region
        $region49: #{tpu_custom_call.1} parent=47 // pred_check
          %p299 = pneg %p47
        $region50: #{tpu_custom_call.1} parent=47 // pred_check_branch
          %301 = sbr.rel (%p299) target = $region52
        $region51: #{tpu_custom_call.1} parent=47 // pred_region
          %302 = dma.done %s295, 1024
        $region52: #{tpu_custom_call.1} parent=47 // pred_fallthru
          _
        // Predicated region
        $region53: #{tpu_custom_call.1} parent=47 // pred_check
          %p303 = pneg %p68
        $region54: #{tpu_custom_call.1} parent=47 // pred_check_branch
          %305 = sbr.rel (%p303) target = $region56
        $region55: #{tpu_custom_call.1} parent=47 // pred_region
          %306 = dma.done [#allocation6], 1024
        $region56: #{tpu_custom_call.1} parent=47 // pred_fallthru
          _
        // Predicated region
        $region57: #{tpu_custom_call.1} parent=47 // pred_check
          %p307 = pneg %p89
        $region58: #{tpu_custom_call.1} parent=47 // pred_check_branch
          %309 = sbr.rel (%p307) target = $region60
        $region59: #{tpu_custom_call.1} parent=47 // pred_region
          %310 = dma.done [#allocation6], 9216
        $region60: #{tpu_custom_call.1} parent=47 // pred_fallthru
          _
        // Predicated region
        $region61: #{tpu_custom_call.1} parent=47 // pred_check
          %p311 = pneg %p110
        $region62: #{tpu_custom_call.1} parent=47 // pred_check_branch
          %313 = sbr.rel (%p311) target = $region64
        $region63: #{tpu_custom_call.1} parent=47 // pred_region
          %314 = dma.done [#allocation9], 1024
        $region64: #{tpu_custom_call.1} parent=47 // pred_fallthru
          _
        %s315 = sand.u32 %s34, 1
        %s316 = scalar_lea.sflag [#allocation3], %s315
        %s317 = sand.u32 %s34, 1
        %s318 = smul.addr %s317, 64
        %s319 = scalar_lea.vmem [#allocation2], %s318
        %p320 = pneg %p47
        %p321 = pneg %p44
        %p322 = pneg %p68
        %p323 = pneg %p65
        %p324 = pneg %p89
        %p325 = pneg %p86
        %p326 = pneg %p110
        %p327 = pneg %p107
        %p328 = pneg %p131
        %p329 = pneg %p128
        %p330 = pneg %p152
        %p331 = pneg %p149
        %p332 = pneg %p173
        %p333 = pneg %p170
        %p334 = pneg %p199
        %p335 = pneg %p196
        %s336 = sand.u32 %s186, 1
        %s337 = scalar_lea.sflag [#allocation4], %s336
        %s338 = sand.u32 %s186, 1
        %s339 = smul.addr %s338, 64
        %s340 = scalar_lea.vmem [#allocation10], %s339
        %v342 = vld [vmem:[%s298] sm:$0xff]
        %v343 = vld [vmem:[%s298 + $0x8] sm:$0xff]
        %v344 = vld [vmem:[%s298 + $0x10] sm:$0xff]
        %v345 = vld [vmem:[%s298 + $0x18] sm:$0xff]
        %v346 = vld [vmem:[%s298 + $0x20] sm:$0xff]
        %v347 = vld [vmem:[%s298 + $0x28] sm:$0xff]
        %v348 = vld [vmem:[%s298 + $0x30] sm:$0xff]
        %v349 = vld [vmem:[%s298 + $0x38] sm:$0xff]
        %v350 = vpack.c.bf16 %v343, %v342
        %v351 = vpack.c.bf16 %v345, %v344
        %v352 = vpack.c.bf16 %v347, %v346
        %v353 = vpack.c.bf16 %v349, %v348
        %v354 = vld [vmem:[#allocation5] sm:$0xf]
        %v355 = vld [vmem:[#allocation5 + $0x4] sm:$0xf]
        %v356 = vld [vmem:[#allocation5 + $0x8] sm:$0xf]
        %v357 = vld [vmem:[#allocation5 + $0xc] sm:$0xf]
        %v358 = vld [vmem:[#allocation5 + $0x10] sm:$0xf]
        %v359 = vld [vmem:[#allocation5 + $0x14] sm:$0xf]
        %v360 = vld [vmem:[#allocation5 + $0x18] sm:$0xf]
        %v361 = vld [vmem:[#allocation5 + $0x1c] sm:$0xf]
        %v362 = vld [vmem:[#allocation5 + $0x20] sm:$0xf]
        %v363 = vld [vmem:[#allocation5 + $0x24] sm:$0xf]
        %v364 = vld [vmem:[#allocation5 + $0x28] sm:$0xf]
        %v365 = vld [vmem:[#allocation5 + $0x2c] sm:$0xf]
        %v366 = vld [vmem:[#allocation5 + $0x30] sm:$0xf]
        %v367 = vld [vmem:[#allocation5 + $0x34] sm:$0xf]
        %v368 = vld [vmem:[#allocation5 + $0x38] sm:$0xf]
        %v369 = vld [vmem:[#allocation5 + $0x3c] sm:$0xf]
        %v370 = vld [vmem:[%s4] sm:$0x1]
        %v372 = vlaneseq
        %v373 = vshrl.u32 %v372, 7
        %v374 = vsub.s32 0, %v373
        %v375 = vrot.slane %v370, %v374
        %v393 = vunpack.c.l.b16 %v354
        %v394 = vunpack.c.l.b16 %v355
        %v395 = vunpack.c.l.b16 %v356
        %v396 = vunpack.c.l.b16 %v357
        %v397 = vunpack.c.l.b16 %v358
        %v398 = vunpack.c.l.b16 %v359
        %v399 = vunpack.c.l.b16 %v360
        %v400 = vunpack.c.l.b16 %v361
        %v401 = vunpack.c.l.b16 %v362
        %v402 = vunpack.c.l.b16 %v363
        %v403 = vunpack.c.l.b16 %v364
        %v404 = vunpack.c.l.b16 %v365
        %v405 = vunpack.c.l.b16 %v366
        %v406 = vunpack.c.l.b16 %v367
        %v407 = vunpack.c.l.b16 %v368
        %v408 = vunpack.c.l.b16 %v369
        %v409 = vpack.c.b16 %v394, %v393
        %v410 = vpack.c.b16 %v396, %v395
        %v411 = vpack.c.b16 %v398, %v397
        %v412 = vpack.c.b16 %v400, %v399
        %v413 = vpack.c.b16 %v402, %v401
        %v414 = vpack.c.b16 %v404, %v403
        %v415 = vpack.c.b16 %v406, %v405
        %v416 = vpack.c.b16 %v408, %v407
        %425 = vmatprep.subr.bf16.mxu0 0
        %426 = vmatpush1.bf16.msra.mxu0 %v416
        %427 = vmatprep.subr.bf16.mxu0 0
        %428 = vmatpush1.bf16.msra.mxu0 %v415
        %429 = vmatprep.subr.bf16.mxu0 0
        %430 = vmatpush1.bf16.msra.mxu0 %v414
        %431 = vmatprep.subr.bf16.mxu0 0
        %432 = vmatpush1.bf16.msra.mxu0 %v413
        %433 = vmatprep.subr.bf16.mxu0 0
        %434 = vmatpush1.bf16.msra.mxu0 %v412
        %435 = vmatprep.subr.bf16.mxu0 0
        %436 = vmatpush1.bf16.msra.mxu0 %v411
        %437 = vmatprep.subr.bf16.mxu0 0
        %438 = vmatpush1.bf16.msra.mxu0 %v410
        %439 = vmatprep.subr.bf16.mxu0 0
        %440 = vmatpush1.bf16.msra.mxu0 %v409
        %441 = vmatprep.subr.bf16.mxu0 0
        %442 = vmatpush2.bf16.msra.mxu0 0
        %443 = vmatprep.subr.bf16.mxu0 0
        %444 = vmatpush2.bf16.msra.mxu0 0
        %445 = vmatprep.subr.bf16.mxu0 0
        %446 = vmatpush2.bf16.msra.mxu0 0
        %447 = vmatprep.subr.bf16.mxu0 0
        %448 = vmatpush2.bf16.msra.mxu0 0
        %449 = vmatprep.subr.bf16.mxu0 0
        %450 = vmatpush2.bf16.msra.mxu0 0
        %451 = vmatprep.subr.bf16.mxu0 0
        %452 = vmatpush2.bf16.msra.mxu0 0
        %453 = vmatprep.subr.bf16.mxu0 0
        %454 = vmatpush2.bf16.msra.mxu0 0
        %455 = vmatprep.subr.bf16.mxu0 0
        %456 = vmatpush2.bf16.msra.mxu0 0
        %457 = vmatprep.mubr.bf16.mxu0 0
        %458 = vmatmul.mubr.bf16.gmra.mxu0 %v350
        %v459 = vpop.f32.mrf.mxu0
        %v460 = vadd.f32 %v375, %v459
        %v461 = vpop.f32.mrf.mxu0
        %v462 = vpop.f32.mrf.mxu0
        %v463 = vadd.f32 %v375, %v462
        %v464 = vpop.f32.mrf.mxu0
        %465 = vmatprep.mubr.bf16.mxu0 0
        %466 = vmatmul.mubr.bf16.gmra.mxu0 %v351
        %v467 = vpop.f32.mrf.mxu0
        %v468 = vadd.f32 %v375, %v467
        %v469 = vpop.f32.mrf.mxu0
        %v470 = vpop.f32.mrf.mxu0
        %v471 = vadd.f32 %v375, %v470
        %v472 = vpop.f32.mrf.mxu0
        %473 = vmatprep.mubr.bf16.mxu0 0
        %474 = vmatmul.mubr.bf16.gmra.mxu0 %v352
        %v475 = vpop.f32.mrf.mxu0
        %v476 = vadd.f32 %v375, %v475
        %v477 = vpop.f32.mrf.mxu0
        %v478 = vpop.f32.mrf.mxu0
        %v479 = vadd.f32 %v375, %v478
        %v480 = vpop.f32.mrf.mxu0
        %481 = vmatprep.mubr.bf16.mxu0 0
        %482 = vmatmul.mubr.bf16.gmra.mxu0 %v353
        %v483 = vpop.f32.mrf.mxu0
        %v484 = vadd.f32 %v375, %v483
        %v485 = vpop.f32.mrf.mxu0
        %v486 = vpop.f32.mrf.mxu0
        %v487 = vadd.f32 %v375, %v486
        %v488 = vpop.f32.mrf.mxu0
        %489 = vdwg.mxu0
        %v490 = vmax.f32 %v460, 0.0
        %v491 = vmax.f32 %v463, 0.0
        %v492 = vmax.f32 %v468, 0.0
        %v493 = vmax.f32 %v471, 0.0
        %v494 = vmax.f32 %v476, 0.0
        %v495 = vmax.f32 %v479, 0.0
        %v496 = vmax.f32 %v484, 0.0
        %v497 = vmax.f32 %v487, 0.0
        %v499 = vrot.slane 0.0, 7
        %vm509 = vcmask 1040384
        %v510 = vsel %vm509, %v499, %v499
        %v511 = vrot.slane %v490, 7
        %v512 = vsel %vm509, %v499, %v511
        %v513 = vsel %vm509, %v511, %v499
        %v514 = vrot.slane %v491, 7
        %v515 = vsel %vm509, %v499, %v514
        %v516 = vsel %vm509, %v514, %v499
        %v517 = vrot.slane %v492, 7
        %v518 = vsel %vm509, %v499, %v517
        %v519 = vsel %vm509, %v517, %v499
        %v520 = vrot.slane %v493, 7
        %v521 = vsel %vm509, %v499, %v520
        %v522 = vsel %vm509, %v520, %v499
        %v523 = vrot.slane %v494, 7
        %v524 = vsel %vm509, %v499, %v523
        %v525 = vsel %vm509, %v523, %v499
        %v526 = vrot.slane %v495, 7
        %v527 = vsel %vm509, %v499, %v526
        %v528 = vsel %vm509, %v526, %v499
        %v529 = vrot.slane %v496, 7
        %v530 = vsel %vm509, %v499, %v529
        %v531 = vsel %vm509, %v529, %v499
        %v532 = vrot.slane %v497, 7
        %v533 = vsel %vm509, %v499, %v532
        %v534 = vsel %vm509, %v532, %v499
        %v552 = vsel %vm509, %v499, %v499
        %vm553 = vcmask 1046528
        %v554 = vrot.slane 0.0, 1
        %v555 = vsel %vm553, %v554, %v554
        %v556 = vrot.slane %v490, 1
        %v557 = vsel %vm553, %v554, %v556
        %v558 = vsel %vm553, %v556, %v554
        %v559 = vrot.slane %v491, 1
        %v560 = vsel %vm553, %v554, %v559
        %v561 = vsel %vm553, %v559, %v554
        %v562 = vrot.slane %v492, 1
        %v563 = vsel %vm553, %v554, %v562
        %v564 = vsel %vm553, %v562, %v554
        %v565 = vrot.slane %v493, 1
        %v566 = vsel %vm553, %v554, %v565
        %v567 = vsel %vm553, %v565, %v554
        %v568 = vrot.slane %v494, 1
        %v569 = vsel %vm553, %v554, %v568
        %v570 = vsel %vm553, %v568, %v554
        %v571 = vrot.slane %v495, 1
        %v572 = vsel %vm553, %v554, %v571
        %v573 = vsel %vm553, %v571, %v554
        %v574 = vrot.slane %v496, 1
        %v575 = vsel %vm553, %v554, %v574
        %v576 = vsel %vm553, %v574, %v554
        %v577 = vrot.slane %v497, 1
        %v578 = vsel %vm553, %v554, %v577
        %v579 = vsel %vm553, %v577, %v554
        %v598 = vsel %vm553, %v554, %v554
        %v599 = vpack.c.bf16 %v510, %v552
        %v600 = vpack.c.bf16 %v513, %v512
        %v601 = vpack.c.bf16 %v516, %v515
        %v602 = vpack.c.bf16 %v519, %v518
        %v603 = vpack.c.bf16 %v522, %v521
        %v604 = vpack.c.bf16 %v525, %v524
        %v605 = vpack.c.bf16 %v528, %v527
        %v606 = vpack.c.bf16 %v531, %v530
        %v607 = vpack.c.bf16 %v534, %v533
        %v608 = vpack.c.bf16 %v510, %v510
        %v609 = vpack.c.bf16 0.0, 0.0
        %v610 = vpack.c.bf16 0.0, %v490
        %v611 = vpack.c.bf16 0.0, %v491
        %v612 = vpack.c.bf16 0.0, %v492
        %v613 = vpack.c.bf16 0.0, %v493
        %v614 = vpack.c.bf16 0.0, %v494
        %v615 = vpack.c.bf16 0.0, %v495
        %v616 = vpack.c.bf16 0.0, %v496
        %v617 = vpack.c.bf16 0.0, %v497
        %v618 = vpack.c.bf16 %v557, %v555
        %v619 = vpack.c.bf16 %v560, %v558
        %v620 = vpack.c.bf16 %v563, %v561
        %v621 = vpack.c.bf16 %v566, %v564
        %v622 = vpack.c.bf16 %v569, %v567
        %v623 = vpack.c.bf16 %v572, %v570
        %v624 = vpack.c.bf16 %v575, %v573
        %v625 = vpack.c.bf16 %v578, %v576
        %v626 = vpack.c.bf16 %v555, %v579
        %v627 = vpack.c.bf16 %v598, %v555
        %v628 = vld [vmem:[#allocation7] sm:$0xf]
        %v629 = vld [vmem:[#allocation7 + $0x4] sm:$0xf]
        %v630 = vld [vmem:[#allocation7 + $0x8] sm:$0xf]
        %v631 = vld [vmem:[#allocation7 + $0xc] sm:$0xf]
        %v632 = vld [vmem:[#allocation7 + $0x10] sm:$0xf]
        %v633 = vld [vmem:[#allocation7 + $0x14] sm:$0xf]
        %v634 = vld [vmem:[#allocation7 + $0x18] sm:$0xf]
        %v635 = vld [vmem:[#allocation7 + $0x1c] sm:$0xf]
        %v636 = vld [vmem:[#allocation7 + $0x20] sm:$0xf]
        %v637 = vld [vmem:[#allocation7 + $0x24] sm:$0xf]
        %v638 = vld [vmem:[#allocation7 + $0x28] sm:$0xf]
        %v639 = vld [vmem:[#allocation7 + $0x2c] sm:$0xf]
        %v640 = vld [vmem:[#allocation7 + $0x30] sm:$0xf]
        %v641 = vld [vmem:[#allocation7 + $0x34] sm:$0xf]
        %v642 = vld [vmem:[#allocation7 + $0x38] sm:$0xf]
        %v643 = vld [vmem:[#allocation7 + $0x3c] sm:$0xf]
        %v644 = vld [vmem:[#allocation7 + $0x40] sm:$0xf]
        %v645 = vld [vmem:[#allocation7 + $0x44] sm:$0xf]
        %v646 = vld [vmem:[#allocation7 + $0x48] sm:$0xf]
        %v647 = vld [vmem:[#allocation7 + $0x4c] sm:$0xf]
        %v648 = vld [vmem:[#allocation7 + $0x50] sm:$0xf]
        %v649 = vld [vmem:[#allocation7 + $0x54] sm:$0xf]
        %v650 = vld [vmem:[#allocation7 + $0x58] sm:$0xf]
        %v651 = vld [vmem:[#allocation7 + $0x5c] sm:$0xf]
        %v652 = vld [vmem:[#allocation7 + $0x60] sm:$0xf]
        %v653 = vld [vmem:[#allocation7 + $0x64] sm:$0xf]
        %v654 = vld [vmem:[#allocation7 + $0x68] sm:$0xf]
        %v655 = vld [vmem:[#allocation7 + $0x6c] sm:$0xf]
        %v656 = vld [vmem:[#allocation7 + $0x70] sm:$0xf]
        %v657 = vld [vmem:[#allocation7 + $0x74] sm:$0xf]
        %v658 = vld [vmem:[#allocation7 + $0x78] sm:$0xf]
        %v659 = vld [vmem:[#allocation7 + $0x7c] sm:$0xf]
        %v660 = vld [vmem:[#allocation7 + $0x80] sm:$0xf]
        %v661 = vld [vmem:[#allocation7 + $0x84] sm:$0xf]
        %v662 = vld [vmem:[#allocation7 + $0x88] sm:$0xf]
        %v663 = vld [vmem:[#allocation7 + $0x8c] sm:$0xf]
        %v664 = vld [vmem:[#allocation7 + $0x90] sm:$0xf]
        %v665 = vld [vmem:[#allocation7 + $0x94] sm:$0xf]
        %v666 = vld [vmem:[#allocation7 + $0x98] sm:$0xf]
        %v667 = vld [vmem:[#allocation7 + $0x9c] sm:$0xf]
        %v668 = vld [vmem:[#allocation7 + $0xa0] sm:$0xf]
        %v669 = vld [vmem:[#allocation7 + $0xa4] sm:$0xf]
        %v670 = vld [vmem:[#allocation7 + $0xa8] sm:$0xf]
        %v671 = vld [vmem:[#allocation7 + $0xac] sm:$0xf]
        %v672 = vld [vmem:[#allocation7 + $0xb0] sm:$0xf]
        %v673 = vld [vmem:[#allocation7 + $0xb4] sm:$0xf]
        %v674 = vld [vmem:[#allocation7 + $0xb8] sm:$0xf]
        %v675 = vld [vmem:[#allocation7 + $0xbc] sm:$0xf]
        %s676 = scalar_lea.vmem [#allocation7], 192
        %v677 = vld [vmem:[%s676] sm:$0xf]
        %v678 = vld [vmem:[%s676 + $0x4] sm:$0xf]
        %v679 = vld [vmem:[%s676 + $0x8] sm:$0xf]
        %v680 = vld [vmem:[%s676 + $0xc] sm:$0xf]
        %v681 = vld [vmem:[%s676 + $0x10] sm:$0xf]
        %v682 = vld [vmem:[%s676 + $0x14] sm:$0xf]
        %v683 = vld [vmem:[%s676 + $0x18] sm:$0xf]
        %v684 = vld [vmem:[%s676 + $0x1c] sm:$0xf]
        %v685 = vld [vmem:[%s676 + $0x20] sm:$0xf]
        %v686 = vld [vmem:[%s676 + $0x24] sm:$0xf]
        %v687 = vld [vmem:[%s676 + $0x28] sm:$0xf]
        %v688 = vld [vmem:[%s676 + $0x2c] sm:$0xf]
        %v689 = vld [vmem:[%s676 + $0x30] sm:$0xf]
        %v690 = vld [vmem:[%s676 + $0x34] sm:$0xf]
        %v691 = vld [vmem:[%s676 + $0x38] sm:$0xf]
        %v692 = vld [vmem:[%s676 + $0x3c] sm:$0xf]
        %v693 = vld [vmem:[%s676 + $0x40] sm:$0xf]
        %v694 = vld [vmem:[%s676 + $0x44] sm:$0xf]
        %v695 = vld [vmem:[%s676 + $0x48] sm:$0xf]
        %v696 = vld [vmem:[%s676 + $0x4c] sm:$0xf]
        %v697 = vld [vmem:[%s676 + $0x50] sm:$0xf]
        %v698 = vld [vmem:[%s676 + $0x54] sm:$0xf]
        %v699 = vld [vmem:[%s676 + $0x58] sm:$0xf]
        %v700 = vld [vmem:[%s676 + $0x5c] sm:$0xf]
        %v701 = vld [vmem:[%s676 + $0x60] sm:$0xf]
        %v702 = vld [vmem:[%s676 + $0x64] sm:$0xf]
        %v703 = vld [vmem:[%s676 + $0x68] sm:$0xf]
        %v704 = vld [vmem:[%s676 + $0x6c] sm:$0xf]
        %v705 = vld [vmem:[%s676 + $0x70] sm:$0xf]
        %v706 = vld [vmem:[%s676 + $0x74] sm:$0xf]
        %v707 = vld [vmem:[%s676 + $0x78] sm:$0xf]
        %v708 = vld [vmem:[%s676 + $0x7c] sm:$0xf]
        %v709 = vld [vmem:[%s676 + $0x80] sm:$0xf]
        %v710 = vld [vmem:[%s676 + $0x84] sm:$0xf]
        %v711 = vld [vmem:[%s676 + $0x88] sm:$0xf]
        %v712 = vld [vmem:[%s676 + $0x8c] sm:$0xf]
        %v713 = vld [vmem:[%s676 + $0x90] sm:$0xf]
        %v714 = vld [vmem:[%s676 + $0x94] sm:$0xf]
        %v715 = vld [vmem:[%s676 + $0x98] sm:$0xf]
        %v716 = vld [vmem:[%s676 + $0x9c] sm:$0xf]
        %v717 = vld [vmem:[%s676 + $0xa0] sm:$0xf]
        %v718 = vld [vmem:[%s676 + $0xa4] sm:$0xf]
        %v719 = vld [vmem:[%s676 + $0xa8] sm:$0xf]
        %v720 = vld [vmem:[%s676 + $0xac] sm:$0xf]
        %v721 = vld [vmem:[%s676 + $0xb0] sm:$0xf]
        %v722 = vld [vmem:[%s676 + $0xb4] sm:$0xf]
        %v723 = vld [vmem:[%s676 + $0xb8] sm:$0xf]
        %v724 = vld [vmem:[%s676 + $0xbc] sm:$0xf]
        %v773 = vunpack.c.l.b16 %v677
        %v774 = vunpack.c.l.b16 %v678
        %v775 = vunpack.c.l.b16 %v679
        %v776 = vunpack.c.l.b16 %v680
        %v777 = vunpack.c.l.b16 %v681
        %v778 = vunpack.c.l.b16 %v682
        %v779 = vunpack.c.l.b16 %v683
        %v780 = vunpack.c.l.b16 %v684
        %v781 = vunpack.c.l.b16 %v685
        %v782 = vunpack.c.l.b16 %v686
        %v783 = vunpack.c.l.b16 %v687
        %v784 = vunpack.c.l.b16 %v688
        %v785 = vunpack.c.l.b16 %v689
        %v786 = vunpack.c.l.b16 %v690
        %v787 = vunpack.c.l.b16 %v691
        %v788 = vunpack.c.l.b16 %v692
        %v789 = vunpack.c.l.b16 %v693
        %v790 = vunpack.c.l.b16 %v694
        %v791 = vunpack.c.l.b16 %v695
        %v792 = vunpack.c.l.b16 %v696
        %v793 = vunpack.c.l.b16 %v697
        %v794 = vunpack.c.l.b16 %v698
        %v795 = vunpack.c.l.b16 %v699
        %v796 = vunpack.c.l.b16 %v700
        %v797 = vunpack.c.l.b16 %v701
        %v798 = vunpack.c.l.b16 %v702
        %v799 = vunpack.c.l.b16 %v703
        %v800 = vunpack.c.l.b16 %v704
        %v801 = vunpack.c.l.b16 %v705
        %v802 = vunpack.c.l.b16 %v706
        %v803 = vunpack.c.l.b16 %v707
        %v804 = vunpack.c.l.b16 %v708
        %v805 = vunpack.c.l.b16 %v709
        %v806 = vunpack.c.l.b16 %v710
        %v807 = vunpack.c.l.b16 %v711
        %v808 = vunpack.c.l.b16 %v712
        %v809 = vunpack.c.l.b16 %v713
        %v810 = vunpack.c.l.b16 %v714
        %v811 = vunpack.c.l.b16 %v715
        %v812 = vunpack.c.l.b16 %v716
        %v813 = vunpack.c.l.b16 %v717
        %v814 = vunpack.c.l.b16 %v718
        %v815 = vunpack.c.l.b16 %v719
        %v816 = vunpack.c.l.b16 %v720
        %v817 = vunpack.c.l.b16 %v721
        %v818 = vunpack.c.l.b16 %v722
        %v819 = vunpack.c.l.b16 %v723
        %v820 = vunpack.c.l.b16 %v724
        %v821 = vpack.c.b16 %v774, %v773
        %v822 = vpack.c.b16 %v776, %v775
        %v823 = vpack.c.b16 %v778, %v777
        %v824 = vpack.c.b16 %v780, %v779
        %v825 = vpack.c.b16 %v782, %v781
        %v826 = vpack.c.b16 %v784, %v783
        %v827 = vpack.c.b16 %v786, %v785
        %v828 = vpack.c.b16 %v788, %v787
        %v829 = vpack.c.b16 %v790, %v789
        %v830 = vpack.c.b16 %v792, %v791
        %v831 = vpack.c.b16 %v794, %v793
        %v832 = vpack.c.b16 %v796, %v795
        %v833 = vpack.c.b16 %v798, %v797
        %v834 = vpack.c.b16 %v800, %v799
        %v835 = vpack.c.b16 %v802, %v801
        %v836 = vpack.c.b16 %v804, %v803
        %v837 = vpack.c.b16 %v806, %v805
        %v838 = vpack.c.b16 %v808, %v807
        %v839 = vpack.c.b16 %v810, %v809
        %v840 = vpack.c.b16 %v812, %v811
        %v841 = vpack.c.b16 %v814, %v813
        %v842 = vpack.c.b16 %v816, %v815
        %v843 = vpack.c.b16 %v818, %v817
        %v844 = vpack.c.b16 %v820, %v819
        %869 = vmatprep.subr.bf16.mxu0 0
        %870 = vmatpush1.bf16.msra.mxu0 %v828
        %871 = vmatprep.subr.bf16.mxu0 0
        %872 = vmatpush1.bf16.msra.mxu0 %v827
        %873 = vmatprep.subr.bf16.mxu0 0
        %874 = vmatpush1.bf16.msra.mxu0 %v826
        %875 = vmatprep.subr.bf16.mxu0 0
        %876 = vmatpush1.bf16.msra.mxu0 %v825
        %877 = vmatprep.subr.bf16.mxu0 0
        %878 = vmatpush1.bf16.msra.mxu0 %v824
        %879 = vmatprep.subr.bf16.mxu0 0
        %880 = vmatpush1.bf16.msra.mxu0 %v823
        %881 = vmatprep.subr.bf16.mxu0 0
        %882 = vmatpush1.bf16.msra.mxu0 %v822
        %883 = vmatprep.subr.bf16.mxu0 0
        %884 = vmatpush1.bf16.msra.mxu0 %v821
        %885 = vmatprep.subr.bf16.mxu0 0
        %886 = vmatpush2.bf16.msra.mxu0 %v836
        %887 = vmatprep.subr.bf16.mxu0 0
        %888 = vmatpush2.bf16.msra.mxu0 %v835
        %889 = vmatprep.subr.bf16.mxu0 0
        %890 = vmatpush2.bf16.msra.mxu0 %v834
        %891 = vmatprep.subr.bf16.mxu0 0
        %892 = vmatpush2.bf16.msra.mxu0 %v833
        %893 = vmatprep.subr.bf16.mxu0 0
        %894 = vmatpush2.bf16.msra.mxu0 %v832
        %895 = vmatprep.subr.bf16.mxu0 0
        %896 = vmatpush2.bf16.msra.mxu0 %v831
        %897 = vmatprep.subr.bf16.mxu0 0
        %898 = vmatpush2.bf16.msra.mxu0 %v830
        %899 = vmatprep.subr.bf16.mxu0 0
        %900 = vmatpush2.bf16.msra.mxu0 %v829
        %901 = vmatprep.mubr.bf16.mxu0 %v610
        %902 = vmatmul.mubr.bf16.gmra.mxu0 %v600
        %v903 = vpop.f32.mrf.mxu0
        %v904 = vadd.f32 0.0, %v903
        %v905 = vpop.f32.mrf.mxu0
        %v906 = vpop.f32.mrf.mxu0
        %v907 = vadd.f32 0.0, %v906
        %v908 = vpop.f32.mrf.mxu0
        %909 = vmatprep.mubr.bf16.mxu0 %v611
        %910 = vmatmul.mubr.bf16.gmra.mxu0 %v601
        %v911 = vpop.f32.mrf.mxu0
        %v912 = vadd.f32 0.0, %v911
        %v913 = vpop.f32.mrf.mxu0
        %v914 = vpop.f32.mrf.mxu0
        %v915 = vadd.f32 0.0, %v914
        %v916 = vpop.f32.mrf.mxu0
        %917 = vmatprep.mubr.bf16.mxu0 %v612
        %918 = vmatmul.mubr.bf16.gmra.mxu0 %v602
        %v919 = vpop.f32.mrf.mxu0
        %v920 = vadd.f32 0.0, %v919
        %v921 = vpop.f32.mrf.mxu0
        %v922 = vpop.f32.mrf.mxu0
        %v923 = vadd.f32 0.0, %v922
        %v924 = vpop.f32.mrf.mxu0
        %925 = vmatprep.mubr.bf16.mxu0 %v613
        %926 = vmatmul.mubr.bf16.gmra.mxu0 %v603
        %v927 = vpop.f32.mrf.mxu0
        %v928 = vadd.f32 0.0, %v927
        %v929 = vpop.f32.mrf.mxu0
        %v930 = vpop.f32.mrf.mxu0
        %v931 = vadd.f32 0.0, %v930
        %v932 = vpop.f32.mrf.mxu0
        %933 = vmatprep.mubr.bf16.mxu0 %v614
        %934 = vmatmul.mubr.bf16.gmra.mxu0 %v604
        %v935 = vpop.f32.mrf.mxu0
        %v936 = vadd.f32 0.0, %v935
        %v937 = vpop.f32.mrf.mxu0
        %v938 = vpop.f32.mrf.mxu0
        %v939 = vadd.f32 0.0, %v938
        %v940 = vpop.f32.mrf.mxu0
        %941 = vmatprep.mubr.bf16.mxu0 %v615
        %942 = vmatmul.mubr.bf16.gmra.mxu0 %v605
        %v943 = vpop.f32.mrf.mxu0
        %v944 = vadd.f32 0.0, %v943
        %v945 = vpop.f32.mrf.mxu0
        %v946 = vpop.f32.mrf.mxu0
        %v947 = vadd.f32 0.0, %v946
        %v948 = vpop.f32.mrf.mxu0
        %949 = vmatprep.mubr.bf16.mxu0 %v616
        %950 = vmatmul.mubr.bf16.gmra.mxu0 %v606
        %v951 = vpop.f32.mrf.mxu0
        %v952 = vadd.f32 0.0, %v951
        %v953 = vpop.f32.mrf.mxu0
        %v954 = vpop.f32.mrf.mxu0
        %v955 = vadd.f32 0.0, %v954
        %v956 = vpop.f32.mrf.mxu0
        %957 = vmatprep.mubr.bf16.mxu0 %v617
        %958 = vmatmul.mubr.bf16.gmra.mxu0 %v607
        %v959 = vpop.f32.mrf.mxu0
        %v960 = vadd.f32 0.0, %v959
        %v961 = vpop.f32.mrf.mxu0
        %v962 = vpop.f32.mrf.mxu0
        %v963 = vadd.f32 0.0, %v962
        %v964 = vpop.f32.mrf.mxu0
        %965 = vdwg.mxu0
        %966 = vmatprep.subr.bf16.mxu0 0
        %967 = vmatpush1.bf16.msra.mxu0 %v844
        %968 = vmatprep.subr.bf16.mxu0 0
        %969 = vmatpush1.bf16.msra.mxu0 %v843
        %970 = vmatprep.subr.bf16.mxu0 0
        %971 = vmatpush1.bf16.msra.mxu0 %v842
        %972 = vmatprep.subr.bf16.mxu0 0
        %973 = vmatpush1.bf16.msra.mxu0 %v841
        %974 = vmatprep.subr.bf16.mxu0 0
        %975 = vmatpush1.bf16.msra.mxu0 %v840
        %976 = vmatprep.subr.bf16.mxu0 0
        %977 = vmatpush1.bf16.msra.mxu0 %v839
        %978 = vmatprep.subr.bf16.mxu0 0
        %979 = vmatpush1.bf16.msra.mxu0 %v838
        %980 = vmatprep.subr.bf16.mxu0 0
        %981 = vmatpush1.bf16.msra.mxu0 %v837
        %982 = vmatprep.subr.bf16.mxu0 0
        %983 = vmatpush2.bf16.msra.mxu0 0
        %984 = vmatprep.subr.bf16.mxu0 0
        %985 = vmatpush2.bf16.msra.mxu0 0
        %986 = vmatprep.subr.bf16.mxu0 0
        %987 = vmatpush2.bf16.msra.mxu0 0
        %988 = vmatprep.subr.bf16.mxu0 0
        %989 = vmatpush2.bf16.msra.mxu0 0
        %990 = vmatprep.subr.bf16.mxu0 0
        %991 = vmatpush2.bf16.msra.mxu0 0
        %992 = vmatprep.subr.bf16.mxu0 0
        %993 = vmatpush2.bf16.msra.mxu0 0
        %994 = vmatprep.subr.bf16.mxu0 0
        %995 = vmatpush2.bf16.msra.mxu0 0
        %996 = vmatprep.subr.bf16.mxu0 0
        %997 = vmatpush2.bf16.msra.mxu0 0
        %998 = vmatprep.mubr.bf16.mxu0 0
        %999 = vmatmul.mubr.bf16.gmra.mxu0 %v619
        %v1000 = vpop.f32.mrf.mxu0
        %v1001 = vadd.f32 %v904, %v1000
        %v1002 = vpop.f32.mrf.mxu0
        %v1003 = vpop.f32.mrf.mxu0
        %v1004 = vadd.f32 %v907, %v1003
        %v1005 = vpop.f32.mrf.mxu0
        %1006 = vmatprep.mubr.bf16.mxu0 0
        %1007 = vmatmul.mubr.bf16.gmra.mxu0 %v620
        %v1008 = vpop.f32.mrf.mxu0
        %v1009 = vadd.f32 %v912, %v1008
        %v1010 = vpop.f32.mrf.mxu0
        %v1011 = vpop.f32.mrf.mxu0
        %v1012 = vadd.f32 %v915, %v1011
        %v1013 = vpop.f32.mrf.mxu0
        %1014 = vmatprep.mubr.bf16.mxu0 0
        %1015 = vmatmul.mubr.bf16.gmra.mxu0 %v621
        %v1016 = vpop.f32.mrf.mxu0
        %v1017 = vadd.f32 %v920, %v1016
        %v1018 = vpop.f32.mrf.mxu0
        %v1019 = vpop.f32.mrf.mxu0
        %v1020 = vadd.f32 %v923, %v1019
        %v1021 = vpop.f32.mrf.mxu0
        %1022 = vmatprep.mubr.bf16.mxu0 0
        %1023 = vmatmul.mubr.bf16.gmra.mxu0 %v622
        %v1024 = vpop.f32.mrf.mxu0
        %v1025 = vadd.f32 %v928, %v1024
        %v1026 = vpop.f32.mrf.mxu0
        %v1027 = vpop.f32.mrf.mxu0
        %v1028 = vadd.f32 %v931, %v1027
        %v1029 = vpop.f32.mrf.mxu0
        %1030 = vmatprep.mubr.bf16.mxu0 0
        %1031 = vmatmul.mubr.bf16.gmra.mxu0 %v623
        %v1032 = vpop.f32.mrf.mxu0
        %v1033 = vadd.f32 %v936, %v1032
        %v1034 = vpop.f32.mrf.mxu0
        %v1035 = vpop.f32.mrf.mxu0
        %v1036 = vadd.f32 %v939, %v1035
        %v1037 = vpop.f32.mrf.mxu0
        %1038 = vmatprep.mubr.bf16.mxu0 0
        %1039 = vmatmul.mubr.bf16.gmra.mxu0 %v624
        %v1040 = vpop.f32.mrf.mxu0
        %v1041 = vadd.f32 %v944, %v1040
        %v1042 = vpop.f32.mrf.mxu0
        %v1043 = vpop.f32.mrf.mxu0
        %v1044 = vadd.f32 %v947, %v1043
        %v1045 = vpop.f32.mrf.mxu0
        %1046 = vmatprep.mubr.bf16.mxu0 0
        %1047 = vmatmul.mubr.bf16.gmra.mxu0 %v625
        %v1048 = vpop.f32.mrf.mxu0
        %v1049 = vadd.f32 %v952, %v1048
        %v1050 = vpop.f32.mrf.mxu0
        %v1051 = vpop.f32.mrf.mxu0
        %v1052 = vadd.f32 %v955, %v1051
        %v1053 = vpop.f32.mrf.mxu0
        %1054 = vmatprep.mubr.bf16.mxu0 0
        %1055 = vmatmul.mubr.bf16.gmra.mxu0 %v626
        %v1056 = vpop.f32.mrf.mxu0
        %v1057 = vadd.f32 %v960, %v1056
        %v1058 = vpop.f32.mrf.mxu0
        %v1059 = vpop.f32.mrf.mxu0
        %v1060 = vadd.f32 %v963, %v1059
        %v1061 = vpop.f32.mrf.mxu0
        %1062 = vdwg.mxu0
        %v1111 = vunpack.c.l.b16 %v628
        %v1112 = vunpack.c.l.b16 %v629
        %v1113 = vunpack.c.l.b16 %v630
        %v1114 = vunpack.c.l.b16 %v631
        %v1115 = vunpack.c.l.b16 %v632
        %v1116 = vunpack.c.l.b16 %v633
        %v1117 = vunpack.c.l.b16 %v634
        %v1118 = vunpack.c.l.b16 %v635
        %v1119 = vunpack.c.l.b16 %v636
        %v1120 = vunpack.c.l.b16 %v637
        %v1121 = vunpack.c.l.b16 %v638
        %v1122 = vunpack.c.l.b16 %v639
        %v1123 = vunpack.c.l.b16 %v640
        %v1124 = vunpack.c.l.b16 %v641
        %v1125 = vunpack.c.l.b16 %v642
        %v1126 = vunpack.c.l.b16 %v643
        %v1127 = vunpack.c.l.b16 %v644
        %v1128 = vunpack.c.l.b16 %v645
        %v1129 = vunpack.c.l.b16 %v646
        %v1130 = vunpack.c.l.b16 %v647
        %v1131 = vunpack.c.l.b16 %v648
        %v1132 = vunpack.c.l.b16 %v649
        %v1133 = vunpack.c.l.b16 %v650
        %v1134 = vunpack.c.l.b16 %v651
        %v1135 = vunpack.c.l.b16 %v652
        %v1136 = vunpack.c.l.b16 %v653
        %v1137 = vunpack.c.l.b16 %v654
        %v1138 = vunpack.c.l.b16 %v655
        %v1139 = vunpack.c.l.b16 %v656
        %v1140 = vunpack.c.l.b16 %v657
        %v1141 = vunpack.c.l.b16 %v658
        %v1142 = vunpack.c.l.b16 %v659
        %v1143 = vunpack.c.l.b16 %v660
        %v1144 = vunpack.c.l.b16 %v661
        %v1145 = vunpack.c.l.b16 %v662
        %v1146 = vunpack.c.l.b16 %v663
        %v1147 = vunpack.c.l.b16 %v664
        %v1148 = vunpack.c.l.b16 %v665
        %v1149 = vunpack.c.l.b16 %v666
        %v1150 = vunpack.c.l.b16 %v667
        %v1151 = vunpack.c.l.b16 %v668
        %v1152 = vunpack.c.l.b16 %v669
        %v1153 = vunpack.c.l.b16 %v670
        %v1154 = vunpack.c.l.b16 %v671
        %v1155 = vunpack.c.l.b16 %v672
        %v1156 = vunpack.c.l.b16 %v673
        %v1157 = vunpack.c.l.b16 %v674
        %v1158 = vunpack.c.l.b16 %v675
        %v1159 = vpack.c.b16 %v1112, %v1111
        %v1160 = vpack.c.b16 %v1114, %v1113
        %v1161 = vpack.c.b16 %v1116, %v1115
        %v1162 = vpack.c.b16 %v1118, %v1117
        %v1163 = vpack.c.b16 %v1120, %v1119
        %v1164 = vpack.c.b16 %v1122, %v1121
        %v1165 = vpack.c.b16 %v1124, %v1123
        %v1166 = vpack.c.b16 %v1126, %v1125
        %v1167 = vpack.c.b16 %v1128, %v1127
        %v1168 = vpack.c.b16 %v1130, %v1129
        %v1169 = vpack.c.b16 %v1132, %v1131
        %v1170 = vpack.c.b16 %v1134, %v1133
        %v1171 = vpack.c.b16 %v1136, %v1135
        %v1172 = vpack.c.b16 %v1138, %v1137
        %v1173 = vpack.c.b16 %v1140, %v1139
        %v1174 = vpack.c.b16 %v1142, %v1141
        %v1175 = vpack.c.b16 %v1144, %v1143
        %v1176 = vpack.c.b16 %v1146, %v1145
        %v1177 = vpack.c.b16 %v1148, %v1147
        %v1178 = vpack.c.b16 %v1150, %v1149
        %v1179 = vpack.c.b16 %v1152, %v1151
        %v1180 = vpack.c.b16 %v1154, %v1153
        %v1181 = vpack.c.b16 %v1156, %v1155
        %v1182 = vpack.c.b16 %v1158, %v1157
        %1207 = vmatprep.subr.bf16.mxu0 0
        %1208 = vmatpush1.bf16.msra.mxu0 %v1166
        %1209 = vmatprep.subr.bf16.mxu0 0
        %1210 = vmatpush1.bf16.msra.mxu0 %v1165
        %1211 = vmatprep.subr.bf16.mxu0 0
        %1212 = vmatpush1.bf16.msra.mxu0 %v1164
        %1213 = vmatprep.subr.bf16.mxu0 0
        %1214 = vmatpush1.bf16.msra.mxu0 %v1163
        %1215 = vmatprep.subr.bf16.mxu0 0
        %1216 = vmatpush1.bf16.msra.mxu0 %v1162
        %1217 = vmatprep.subr.bf16.mxu0 0
        %1218 = vmatpush1.bf16.msra.mxu0 %v1161
        %1219 = vmatprep.subr.bf16.mxu0 0
        %1220 = vmatpush1.bf16.msra.mxu0 %v1160
        %1221 = vmatprep.subr.bf16.mxu0 0
        %1222 = vmatpush1.bf16.msra.mxu0 %v1159
        %1223 = vmatprep.subr.bf16.mxu0 0
        %1224 = vmatpush2.bf16.msra.mxu0 %v1174
        %1225 = vmatprep.subr.bf16.mxu0 0
        %1226 = vmatpush2.bf16.msra.mxu0 %v1173
        %1227 = vmatprep.subr.bf16.mxu0 0
        %1228 = vmatpush2.bf16.msra.mxu0 %v1172
        %1229 = vmatprep.subr.bf16.mxu0 0
        %1230 = vmatpush2.bf16.msra.mxu0 %v1171
        %1231 = vmatprep.subr.bf16.mxu0 0
        %1232 = vmatpush2.bf16.msra.mxu0 %v1170
        %1233 = vmatprep.subr.bf16.mxu0 0
        %1234 = vmatpush2.bf16.msra.mxu0 %v1169
        %1235 = vmatprep.subr.bf16.mxu0 0
        %1236 = vmatpush2.bf16.msra.mxu0 %v1168
        %1237 = vmatprep.subr.bf16.mxu0 0
        %1238 = vmatpush2.bf16.msra.mxu0 %v1167
        %1239 = vmatprep.mubr.bf16.mxu0 %v609
        %1240 = vmatmul.mubr.bf16.gmra.mxu0 %v599
        %v1241 = vpop.f32.mrf.mxu0
        %v1242 = vadd.f32 %v1001, %v1241
        %v1243 = vpop.f32.mrf.mxu0
        %v1244 = vpop.f32.mrf.mxu0
        %v1245 = vadd.f32 %v1004, %v1244
        %v1246 = vpop.f32.mrf.mxu0
        %1247 = vmatprep.mubr.bf16.mxu0 %v610
        %1248 = vmatmul.mubr.bf16.gmra.mxu0 %v600
        %v1249 = vpop.f32.mrf.mxu0
        %v1250 = vadd.f32 %v1009, %v1249
        %v1251 = vpop.f32.mrf.mxu0
        %v1252 = vpop.f32.mrf.mxu0
        %v1253 = vadd.f32 %v1012, %v1252
        %v1254 = vpop.f32.mrf.mxu0
        %1255 = vmatprep.mubr.bf16.mxu0 %v611
        %1256 = vmatmul.mubr.bf16.gmra.mxu0 %v601
        %v1257 = vpop.f32.mrf.mxu0
        %v1258 = vadd.f32 %v1017, %v1257
        %v1259 = vpop.f32.mrf.mxu0
        %v1260 = vpop.f32.mrf.mxu0
        %v1261 = vadd.f32 %v1020, %v1260
        %v1262 = vpop.f32.mrf.mxu0
        %1263 = vmatprep.mubr.bf16.mxu0 %v612
        %1264 = vmatmul.mubr.bf16.gmra.mxu0 %v602
        %v1265 = vpop.f32.mrf.mxu0
        %v1266 = vadd.f32 %v1025, %v1265
        %v1267 = vpop.f32.mrf.mxu0
        %v1268 = vpop.f32.mrf.mxu0
        %v1269 = vadd.f32 %v1028, %v1268
        %v1270 = vpop.f32.mrf.mxu0
        %1271 = vmatprep.mubr.bf16.mxu0 %v613
        %1272 = vmatmul.mubr.bf16.gmra.mxu0 %v603
        %v1273 = vpop.f32.mrf.mxu0
        %v1274 = vadd.f32 %v1033, %v1273
        %v1275 = vpop.f32.mrf.mxu0
        %v1276 = vpop.f32.mrf.mxu0
        %v1277 = vadd.f32 %v1036, %v1276
        %v1278 = vpop.f32.mrf.mxu0
        %1279 = vmatprep.mubr.bf16.mxu0 %v614
        %1280 = vmatmul.mubr.bf16.gmra.mxu0 %v604
        %v1281 = vpop.f32.mrf.mxu0
        %v1282 = vadd.f32 %v1041, %v1281
        %v1283 = vpop.f32.mrf.mxu0
        %v1284 = vpop.f32.mrf.mxu0
        %v1285 = vadd.f32 %v1044, %v1284
        %v1286 = vpop.f32.mrf.mxu0
        %1287 = vmatprep.mubr.bf16.mxu0 %v615
        %1288 = vmatmul.mubr.bf16.gmra.mxu0 %v605
        %v1289 = vpop.f32.mrf.mxu0
        %v1290 = vadd.f32 %v1049, %v1289
        %v1291 = vpop.f32.mrf.mxu0
        %v1292 = vpop.f32.mrf.mxu0
        %v1293 = vadd.f32 %v1052, %v1292
        %v1294 = vpop.f32.mrf.mxu0
        %1295 = vmatprep.mubr.bf16.mxu0 %v616
        %1296 = vmatmul.mubr.bf16.gmra.mxu0 %v606
        %v1297 = vpop.f32.mrf.mxu0
        %v1298 = vadd.f32 %v1057, %v1297
        %v1299 = vpop.f32.mrf.mxu0
        %v1300 = vpop.f32.mrf.mxu0
        %v1301 = vadd.f32 %v1060, %v1300
        %v1302 = vpop.f32.mrf.mxu0
        %1303 = vdwg.mxu0
        %1304 = vmatprep.subr.bf16.mxu0 0
        %1305 = vmatpush1.bf16.msra.mxu0 %v1182
        %1306 = vmatprep.subr.bf16.mxu0 0
        %1307 = vmatpush1.bf16.msra.mxu0 %v1181
        %1308 = vmatprep.subr.bf16.mxu0 0
        %1309 = vmatpush1.bf16.msra.mxu0 %v1180
        %1310 = vmatprep.subr.bf16.mxu0 0
        %1311 = vmatpush1.bf16.msra.mxu0 %v1179
        %1312 = vmatprep.subr.bf16.mxu0 0
        %1313 = vmatpush1.bf16.msra.mxu0 %v1178
        %1314 = vmatprep.subr.bf16.mxu0 0
        %1315 = vmatpush1.bf16.msra.mxu0 %v1177
        %1316 = vmatprep.subr.bf16.mxu0 0
        %1317 = vmatpush1.bf16.msra.mxu0 %v1176
        %1318 = vmatprep.subr.bf16.mxu0 0
        %1319 = vmatpush1.bf16.msra.mxu0 %v1175
        %1320 = vmatprep.subr.bf16.mxu0 0
        %1321 = vmatpush2.bf16.msra.mxu0 0
        %1322 = vmatprep.subr.bf16.mxu0 0
        %1323 = vmatpush2.bf16.msra.mxu0 0
        %1324 = vmatprep.subr.bf16.mxu0 0
        %1325 = vmatpush2.bf16.msra.mxu0 0
        %1326 = vmatprep.subr.bf16.mxu0 0
        %1327 = vmatpush2.bf16.msra.mxu0 0
        %1328 = vmatprep.subr.bf16.mxu0 0
        %1329 = vmatpush2.bf16.msra.mxu0 0
        %1330 = vmatprep.subr.bf16.mxu0 0
        %1331 = vmatpush2.bf16.msra.mxu0 0
        %1332 = vmatprep.subr.bf16.mxu0 0
        %1333 = vmatpush2.bf16.msra.mxu0 0
        %1334 = vmatprep.subr.bf16.mxu0 0
        %1335 = vmatpush2.bf16.msra.mxu0 0
        %1336 = vmatprep.mubr.bf16.mxu0 0
        %1337 = vmatmul.mubr.bf16.gmra.mxu0 %v618
        %v1338 = vpop.f32.mrf.mxu0
        %v1339 = vadd.f32 %v1242, %v1338
        %v1340 = vpop.f32.mrf.mxu0
        %v1341 = vpop.f32.mrf.mxu0
        %v1342 = vadd.f32 %v1245, %v1341
        %v1343 = vpop.f32.mrf.mxu0
        %1344 = vmatprep.mubr.bf16.mxu0 0
        %1345 = vmatmul.mubr.bf16.gmra.mxu0 %v619
        %v1346 = vpop.f32.mrf.mxu0
        %v1347 = vadd.f32 %v1250, %v1346
        %v1348 = vpop.f32.mrf.mxu0
        %v1349 = vpop.f32.mrf.mxu0
        %v1350 = vadd.f32 %v1253, %v1349
        %v1351 = vpop.f32.mrf.mxu0
        %1352 = vmatprep.mubr.bf16.mxu0 0
        %1353 = vmatmul.mubr.bf16.gmra.mxu0 %v620
        %v1354 = vpop.f32.mrf.mxu0
        %v1355 = vadd.f32 %v1258, %v1354
        %v1356 = vpop.f32.mrf.mxu0
        %v1357 = vpop.f32.mrf.mxu0
        %v1358 = vadd.f32 %v1261, %v1357
        %v1359 = vpop.f32.mrf.mxu0
        %1360 = vmatprep.mubr.bf16.mxu0 0
        %1361 = vmatmul.mubr.bf16.gmra.mxu0 %v621
        %v1362 = vpop.f32.mrf.mxu0
        %v1363 = vadd.f32 %v1266, %v1362
        %v1364 = vpop.f32.mrf.mxu0
        %v1365 = vpop.f32.mrf.mxu0
        %v1366 = vadd.f32 %v1269, %v1365
        %v1367 = vpop.f32.mrf.mxu0
        %1368 = vmatprep.mubr.bf16.mxu0 0
        %1369 = vmatmul.mubr.bf16.gmra.mxu0 %v622
        %v1370 = vpop.f32.mrf.mxu0
        %v1371 = vadd.f32 %v1274, %v1370
        %v1372 = vpop.f32.mrf.mxu0
        %v1373 = vpop.f32.mrf.mxu0
        %v1374 = vadd.f32 %v1277, %v1373
        %v1375 = vpop.f32.mrf.mxu0
        %1376 = vmatprep.mubr.bf16.mxu0 0
        %1377 = vmatmul.mubr.bf16.gmra.mxu0 %v623
        %v1378 = vpop.f32.mrf.mxu0
        %v1379 = vadd.f32 %v1282, %v1378
        %v1380 = vpop.f32.mrf.mxu0
        %v1381 = vpop.f32.mrf.mxu0
        %v1382 = vadd.f32 %v1285, %v1381
        %v1383 = vpop.f32.mrf.mxu0
        %1384 = vmatprep.mubr.bf16.mxu0 0
        %1385 = vmatmul.mubr.bf16.gmra.mxu0 %v624
        %v1386 = vpop.f32.mrf.mxu0
        %v1387 = vadd.f32 %v1290, %v1386
        %v1388 = vpop.f32.mrf.mxu0
        %v1389 = vpop.f32.mrf.mxu0
        %v1390 = vadd.f32 %v1293, %v1389
        %v1391 = vpop.f32.mrf.mxu0
        %1392 = vmatprep.mubr.bf16.mxu0 0
        %1393 = vmatmul.mubr.bf16.gmra.mxu0 %v625
        %v1394 = vpop.f32.mrf.mxu0
        %v1395 = vadd.f32 %v1298, %v1394
        %v1396 = vpop.f32.mrf.mxu0
        %v1397 = vpop.f32.mrf.mxu0
        %v1398 = vadd.f32 %v1301, %v1397
        %v1399 = vpop.f32.mrf.mxu0
        %1400 = vdwg.mxu0
        %s1401 = scalar_lea.vmem [#allocation7], 384
        %v1402 = vld [vmem:[%s1401] sm:$0xf]
        %v1403 = vld [vmem:[%s1401 + $0x4] sm:$0xf]
        %v1404 = vld [vmem:[%s1401 + $0x8] sm:$0xf]
        %v1405 = vld [vmem:[%s1401 + $0xc] sm:$0xf]
        %v1406 = vld [vmem:[%s1401 + $0x10] sm:$0xf]
        %v1407 = vld [vmem:[%s1401 + $0x14] sm:$0xf]
        %v1408 = vld [vmem:[%s1401 + $0x18] sm:$0xf]
        %v1409 = vld [vmem:[%s1401 + $0x1c] sm:$0xf]
        %v1410 = vld [vmem:[%s1401 + $0x20] sm:$0xf]
        %v1411 = vld [vmem:[%s1401 + $0x24] sm:$0xf]
        %v1412 = vld [vmem:[%s1401 + $0x28] sm:$0xf]
        %v1413 = vld [vmem:[%s1401 + $0x2c] sm:$0xf]
        %v1414 = vld [vmem:[%s1401 + $0x30] sm:$0xf]
        %v1415 = vld [vmem:[%s1401 + $0x34] sm:$0xf]
        %v1416 = vld [vmem:[%s1401 + $0x38] sm:$0xf]
        %v1417 = vld [vmem:[%s1401 + $0x3c] sm:$0xf]
        %v1418 = vld [vmem:[%s1401 + $0x40] sm:$0xf]
        %v1419 = vld [vmem:[%s1401 + $0x44] sm:$0xf]
        %v1420 = vld [vmem:[%s1401 + $0x48] sm:$0xf]
        %v1421 = vld [vmem:[%s1401 + $0x4c] sm:$0xf]
        %v1422 = vld [vmem:[%s1401 + $0x50] sm:$0xf]
        %v1423 = vld [vmem:[%s1401 + $0x54] sm:$0xf]
        %v1424 = vld [vmem:[%s1401 + $0x58] sm:$0xf]
        %v1425 = vld [vmem:[%s1401 + $0x5c] sm:$0xf]
        %v1426 = vld [vmem:[%s1401 + $0x60] sm:$0xf]
        %v1427 = vld [vmem:[%s1401 + $0x64] sm:$0xf]
        %v1428 = vld [vmem:[%s1401 + $0x68] sm:$0xf]
        %v1429 = vld [vmem:[%s1401 + $0x6c] sm:$0xf]
        %v1430 = vld [vmem:[%s1401 + $0x70] sm:$0xf]
        %v1431 = vld [vmem:[%s1401 + $0x74] sm:$0xf]
        %v1432 = vld [vmem:[%s1401 + $0x78] sm:$0xf]
        %v1433 = vld [vmem:[%s1401 + $0x7c] sm:$0xf]
        %v1434 = vld [vmem:[%s1401 + $0x80] sm:$0xf]
        %v1435 = vld [vmem:[%s1401 + $0x84] sm:$0xf]
        %v1436 = vld [vmem:[%s1401 + $0x88] sm:$0xf]
        %v1437 = vld [vmem:[%s1401 + $0x8c] sm:$0xf]
        %v1438 = vld [vmem:[%s1401 + $0x90] sm:$0xf]
        %v1439 = vld [vmem:[%s1401 + $0x94] sm:$0xf]
        %v1440 = vld [vmem:[%s1401 + $0x98] sm:$0xf]
        %v1441 = vld [vmem:[%s1401 + $0x9c] sm:$0xf]
        %v1442 = vld [vmem:[%s1401 + $0xa0] sm:$0xf]
        %v1443 = vld [vmem:[%s1401 + $0xa4] sm:$0xf]
        %v1444 = vld [vmem:[%s1401 + $0xa8] sm:$0xf]
        %v1445 = vld [vmem:[%s1401 + $0xac] sm:$0xf]
        %v1446 = vld [vmem:[%s1401 + $0xb0] sm:$0xf]
        %v1447 = vld [vmem:[%s1401 + $0xb4] sm:$0xf]
        %v1448 = vld [vmem:[%s1401 + $0xb8] sm:$0xf]
        %v1449 = vld [vmem:[%s1401 + $0xbc] sm:$0xf]
        %v1498 = vunpack.c.l.b16 %v1402
        %v1499 = vunpack.c.l.b16 %v1403
        %v1500 = vunpack.c.l.b16 %v1404
        %v1501 = vunpack.c.l.b16 %v1405
        %v1502 = vunpack.c.l.b16 %v1406
        %v1503 = vunpack.c.l.b16 %v1407
        %v1504 = vunpack.c.l.b16 %v1408
        %v1505 = vunpack.c.l.b16 %v1409
        %v1506 = vunpack.c.l.b16 %v1410
        %v1507 = vunpack.c.l.b16 %v1411
        %v1508 = vunpack.c.l.b16 %v1412
        %v1509 = vunpack.c.l.b16 %v1413
        %v1510 = vunpack.c.l.b16 %v1414
        %v1511 = vunpack.c.l.b16 %v1415
        %v1512 = vunpack.c.l.b16 %v1416
        %v1513 = vunpack.c.l.b16 %v1417
        %v1514 = vunpack.c.l.b16 %v1418
        %v1515 = vunpack.c.l.b16 %v1419
        %v1516 = vunpack.c.l.b16 %v1420
        %v1517 = vunpack.c.l.b16 %v1421
        %v1518 = vunpack.c.l.b16 %v1422
        %v1519 = vunpack.c.l.b16 %v1423
        %v1520 = vunpack.c.l.b16 %v1424
        %v1521 = vunpack.c.l.b16 %v1425
        %v1522 = vunpack.c.l.b16 %v1426
        %v1523 = vunpack.c.l.b16 %v1427
        %v1524 = vunpack.c.l.b16 %v1428
        %v1525 = vunpack.c.l.b16 %v1429
        %v1526 = vunpack.c.l.b16 %v1430
        %v1527 = vunpack.c.l.b16 %v1431
        %v1528 = vunpack.c.l.b16 %v1432
        %v1529 = vunpack.c.l.b16 %v1433
        %v1530 = vunpack.c.l.b16 %v1434
        %v1531 = vunpack.c.l.b16 %v1435
        %v1532 = vunpack.c.l.b16 %v1436
        %v1533 = vunpack.c.l.b16 %v1437
        %v1534 = vunpack.c.l.b16 %v1438
        %v1535 = vunpack.c.l.b16 %v1439
        %v1536 = vunpack.c.l.b16 %v1440
        %v1537 = vunpack.c.l.b16 %v1441
        %v1538 = vunpack.c.l.b16 %v1442
        %v1539 = vunpack.c.l.b16 %v1443
        %v1540 = vunpack.c.l.b16 %v1444
        %v1541 = vunpack.c.l.b16 %v1445
        %v1542 = vunpack.c.l.b16 %v1446
        %v1543 = vunpack.c.l.b16 %v1447
        %v1544 = vunpack.c.l.b16 %v1448
        %v1545 = vunpack.c.l.b16 %v1449
        %v1546 = vpack.c.b16 %v1499, %v1498
        %v1547 = vpack.c.b16 %v1501, %v1500
        %v1548 = vpack.c.b16 %v1503, %v1502
        %v1549 = vpack.c.b16 %v1505, %v1504
        %v1550 = vpack.c.b16 %v1507, %v1506
        %v1551 = vpack.c.b16 %v1509, %v1508
        %v1552 = vpack.c.b16 %v1511, %v1510
        %v1553 = vpack.c.b16 %v1513, %v1512
        %v1554 = vpack.c.b16 %v1515, %v1514
        %v1555 = vpack.c.b16 %v1517, %v1516
        %v1556 = vpack.c.b16 %v1519, %v1518
        %v1557 = vpack.c.b16 %v1521, %v1520
        %v1558 = vpack.c.b16 %v1523, %v1522
        %v1559 = vpack.c.b16 %v1525, %v1524
        %v1560 = vpack.c.b16 %v1527, %v1526
        %v1561 = vpack.c.b16 %v1529, %v1528
        %v1562 = vpack.c.b16 %v1531, %v1530
        %v1563 = vpack.c.b16 %v1533, %v1532
        %v1564 = vpack.c.b16 %v1535, %v1534
        %v1565 = vpack.c.b16 %v1537, %v1536
        %v1566 = vpack.c.b16 %v1539, %v1538
        %v1567 = vpack.c.b16 %v1541, %v1540
        %v1568 = vpack.c.b16 %v1543, %v1542
        %v1569 = vpack.c.b16 %v1545, %v1544
        %1594 = vmatprep.subr.bf16.mxu0 0
        %1595 = vmatpush1.bf16.msra.mxu0 %v1553
        %1596 = vmatprep.subr.bf16.mxu0 0
        %1597 = vmatpush1.bf16.msra.mxu0 %v1552
        %1598 = vmatprep.subr.bf16.mxu0 0
        %1599 = vmatpush1.bf16.msra.mxu0 %v1551
        %1600 = vmatprep.subr.bf16.mxu0 0
        %1601 = vmatpush1.bf16.msra.mxu0 %v1550
        %1602 = vmatprep.subr.bf16.mxu0 0
        %1603 = vmatpush1.bf16.msra.mxu0 %v1549
        %1604 = vmatprep.subr.bf16.mxu0 0
        %1605 = vmatpush1.bf16.msra.mxu0 %v1548
        %1606 = vmatprep.subr.bf16.mxu0 0
        %1607 = vmatpush1.bf16.msra.mxu0 %v1547
        %1608 = vmatprep.subr.bf16.mxu0 0
        %1609 = vmatpush1.bf16.msra.mxu0 %v1546
        %1610 = vmatprep.subr.bf16.mxu0 0
        %1611 = vmatpush2.bf16.msra.mxu0 %v1561
        %1612 = vmatprep.subr.bf16.mxu0 0
        %1613 = vmatpush2.bf16.msra.mxu0 %v1560
        %1614 = vmatprep.subr.bf16.mxu0 0
        %1615 = vmatpush2.bf16.msra.mxu0 %v1559
        %1616 = vmatprep.subr.bf16.mxu0 0
        %1617 = vmatpush2.bf16.msra.mxu0 %v1558
        %1618 = vmatprep.subr.bf16.mxu0 0
        %1619 = vmatpush2.bf16.msra.mxu0 %v1557
        %1620 = vmatprep.subr.bf16.mxu0 0
        %1621 = vmatpush2.bf16.msra.mxu0 %v1556
        %1622 = vmatprep.subr.bf16.mxu0 0
        %1623 = vmatpush2.bf16.msra.mxu0 %v1555
        %1624 = vmatprep.subr.bf16.mxu0 0
        %1625 = vmatpush2.bf16.msra.mxu0 %v1554
        %1626 = vmatprep.mubr.bf16.mxu0 %v611
        %1627 = vmatmul.mubr.bf16.gmra.mxu0 %v601
        %v1628 = vpop.f32.mrf.mxu0
        %v1629 = vadd.f32 0.0, %v1628
        %v1630 = vpop.f32.mrf.mxu0
        %v1631 = vpop.f32.mrf.mxu0
        %v1632 = vadd.f32 0.0, %v1631
        %v1633 = vpop.f32.mrf.mxu0
        %1634 = vmatprep.mubr.bf16.mxu0 %v612
        %1635 = vmatmul.mubr.bf16.gmra.mxu0 %v602
        %v1636 = vpop.f32.mrf.mxu0
        %v1637 = vadd.f32 0.0, %v1636
        %v1638 = vpop.f32.mrf.mxu0
        %v1639 = vpop.f32.mrf.mxu0
        %v1640 = vadd.f32 0.0, %v1639
        %v1641 = vpop.f32.mrf.mxu0
        %1642 = vmatprep.mubr.bf16.mxu0 %v613
        %1643 = vmatmul.mubr.bf16.gmra.mxu0 %v603
        %v1644 = vpop.f32.mrf.mxu0
        %v1645 = vadd.f32 0.0, %v1644
        %v1646 = vpop.f32.mrf.mxu0
        %v1647 = vpop.f32.mrf.mxu0
        %v1648 = vadd.f32 0.0, %v1647
        %v1649 = vpop.f32.mrf.mxu0
        %1650 = vmatprep.mubr.bf16.mxu0 %v614
        %1651 = vmatmul.mubr.bf16.gmra.mxu0 %v604
        %v1652 = vpop.f32.mrf.mxu0
        %v1653 = vadd.f32 0.0, %v1652
        %v1654 = vpop.f32.mrf.mxu0
        %v1655 = vpop.f32.mrf.mxu0
        %v1656 = vadd.f32 0.0, %v1655
        %v1657 = vpop.f32.mrf.mxu0
        %1658 = vmatprep.mubr.bf16.mxu0 %v615
        %1659 = vmatmul.mubr.bf16.gmra.mxu0 %v605
        %v1660 = vpop.f32.mrf.mxu0
        %v1661 = vadd.f32 0.0, %v1660
        %v1662 = vpop.f32.mrf.mxu0
        %v1663 = vpop.f32.mrf.mxu0
        %v1664 = vadd.f32 0.0, %v1663
        %v1665 = vpop.f32.mrf.mxu0
        %1666 = vmatprep.mubr.bf16.mxu0 %v616
        %1667 = vmatmul.mubr.bf16.gmra.mxu0 %v606
        %v1668 = vpop.f32.mrf.mxu0
        %v1669 = vadd.f32 0.0, %v1668
        %v1670 = vpop.f32.mrf.mxu0
        %v1671 = vpop.f32.mrf.mxu0
        %v1672 = vadd.f32 0.0, %v1671
        %v1673 = vpop.f32.mrf.mxu0
        %1674 = vmatprep.mubr.bf16.mxu0 %v617
        %1675 = vmatmul.mubr.bf16.gmra.mxu0 %v607
        %v1676 = vpop.f32.mrf.mxu0
        %v1677 = vadd.f32 0.0, %v1676
        %v1678 = vpop.f32.mrf.mxu0
        %v1679 = vpop.f32.mrf.mxu0
        %v1680 = vadd.f32 0.0, %v1679
        %v1681 = vpop.f32.mrf.mxu0
        %1682 = vmatprep.mubr.bf16.mxu0 %v609
        %1683 = vmatmul.mubr.bf16.gmra.mxu0 %v608
        %v1684 = vpop.f32.mrf.mxu0
        %v1685 = vadd.f32 0.0, %v1684
        %v1686 = vpop.f32.mrf.mxu0
        %v1687 = vpop.f32.mrf.mxu0
        %v1688 = vadd.f32 0.0, %v1687
        %v1689 = vpop.f32.mrf.mxu0
        %1690 = vdwg.mxu0
        %1691 = vmatprep.subr.bf16.mxu0 0
        %1692 = vmatpush1.bf16.msra.mxu0 %v1569
        %1693 = vmatprep.subr.bf16.mxu0 0
        %1694 = vmatpush1.bf16.msra.mxu0 %v1568
        %1695 = vmatprep.subr.bf16.mxu0 0
        %1696 = vmatpush1.bf16.msra.mxu0 %v1567
        %1697 = vmatprep.subr.bf16.mxu0 0
        %1698 = vmatpush1.bf16.msra.mxu0 %v1566
        %1699 = vmatprep.subr.bf16.mxu0 0
        %1700 = vmatpush1.bf16.msra.mxu0 %v1565
        %1701 = vmatprep.subr.bf16.mxu0 0
        %1702 = vmatpush1.bf16.msra.mxu0 %v1564
        %1703 = vmatprep.subr.bf16.mxu0 0
        %1704 = vmatpush1.bf16.msra.mxu0 %v1563
        %1705 = vmatprep.subr.bf16.mxu0 0
        %1706 = vmatpush1.bf16.msra.mxu0 %v1562
        %1707 = vmatprep.subr.bf16.mxu0 0
        %1708 = vmatpush2.bf16.msra.mxu0 0
        %1709 = vmatprep.subr.bf16.mxu0 0
        %1710 = vmatpush2.bf16.msra.mxu0 0
        %1711 = vmatprep.subr.bf16.mxu0 0
        %1712 = vmatpush2.bf16.msra.mxu0 0
        %1713 = vmatprep.subr.bf16.mxu0 0
        %1714 = vmatpush2.bf16.msra.mxu0 0
        %1715 = vmatprep.subr.bf16.mxu0 0
        %1716 = vmatpush2.bf16.msra.mxu0 0
        %1717 = vmatprep.subr.bf16.mxu0 0
        %1718 = vmatpush2.bf16.msra.mxu0 0
        %1719 = vmatprep.subr.bf16.mxu0 0
        %1720 = vmatpush2.bf16.msra.mxu0 0
        %1721 = vmatprep.subr.bf16.mxu0 0
        %1722 = vmatpush2.bf16.msra.mxu0 0
        %1723 = vmatprep.mubr.bf16.mxu0 0
        %1724 = vmatmul.mubr.bf16.gmra.mxu0 %v620
        %v1725 = vpop.f32.mrf.mxu0
        %v1726 = vadd.f32 %v1629, %v1725
        %v1727 = vpop.f32.mrf.mxu0
        %v1728 = vpop.f32.mrf.mxu0
        %v1729 = vadd.f32 %v1632, %v1728
        %v1730 = vpop.f32.mrf.mxu0
        %1731 = vmatprep.mubr.bf16.mxu0 0
        %1732 = vmatmul.mubr.bf16.gmra.mxu0 %v621
        %v1733 = vpop.f32.mrf.mxu0
        %v1734 = vadd.f32 %v1637, %v1733
        %v1735 = vpop.f32.mrf.mxu0
        %v1736 = vpop.f32.mrf.mxu0
        %v1737 = vadd.f32 %v1640, %v1736
        %v1738 = vpop.f32.mrf.mxu0
        %1739 = vmatprep.mubr.bf16.mxu0 0
        %1740 = vmatmul.mubr.bf16.gmra.mxu0 %v622
        %v1741 = vpop.f32.mrf.mxu0
        %v1742 = vadd.f32 %v1645, %v1741
        %v1743 = vpop.f32.mrf.mxu0
        %v1744 = vpop.f32.mrf.mxu0
        %v1745 = vadd.f32 %v1648, %v1744
        %v1746 = vpop.f32.mrf.mxu0
        %1747 = vmatprep.mubr.bf16.mxu0 0
        %1748 = vmatmul.mubr.bf16.gmra.mxu0 %v623
        %v1749 = vpop.f32.mrf.mxu0
        %v1750 = vadd.f32 %v1653, %v1749
        %v1751 = vpop.f32.mrf.mxu0
        %v1752 = vpop.f32.mrf.mxu0
        %v1753 = vadd.f32 %v1656, %v1752
        %v1754 = vpop.f32.mrf.mxu0
        %1755 = vmatprep.mubr.bf16.mxu0 0
        %1756 = vmatmul.mubr.bf16.gmra.mxu0 %v624
        %v1757 = vpop.f32.mrf.mxu0
        %v1758 = vadd.f32 %v1661, %v1757
        %v1759 = vpop.f32.mrf.mxu0
        %v1760 = vpop.f32.mrf.mxu0
        %v1761 = vadd.f32 %v1664, %v1760
        %v1762 = vpop.f32.mrf.mxu0
        %1763 = vmatprep.mubr.bf16.mxu0 0
        %1764 = vmatmul.mubr.bf16.gmra.mxu0 %v625
        %v1765 = vpop.f32.mrf.mxu0
        %v1766 = vadd.f32 %v1669, %v1765
        %v1767 = vpop.f32.mrf.mxu0
        %v1768 = vpop.f32.mrf.mxu0
        %v1769 = vadd.f32 %v1672, %v1768
        %v1770 = vpop.f32.mrf.mxu0
        %1771 = vmatprep.mubr.bf16.mxu0 0
        %1772 = vmatmul.mubr.bf16.gmra.mxu0 %v626
        %v1773 = vpop.f32.mrf.mxu0
        %v1774 = vadd.f32 %v1677, %v1773
        %v1775 = vpop.f32.mrf.mxu0
        %v1776 = vpop.f32.mrf.mxu0
        %v1777 = vadd.f32 %v1680, %v1776
        %v1778 = vpop.f32.mrf.mxu0
        %1779 = vmatprep.mubr.bf16.mxu0 0
        %1780 = vmatmul.mubr.bf16.gmra.mxu0 %v627
        %v1781 = vpop.f32.mrf.mxu0
        %v1782 = vadd.f32 %v1685, %v1781
        %v1783 = vpop.f32.mrf.mxu0
        %v1784 = vpop.f32.mrf.mxu0
        %v1785 = vadd.f32 %v1688, %v1784
        %v1786 = vpop.f32.mrf.mxu0
        %1787 = vdwg.mxu0
        %v1788 = vadd.f32 %v1339, %v1726
        %v1789 = vadd.f32 %v1342, %v1729
        %v1790 = vadd.f32 %v1347, %v1734
        %v1791 = vadd.f32 %v1350, %v1737
        %v1792 = vadd.f32 %v1355, %v1742
        %v1793 = vadd.f32 %v1358, %v1745
        %v1794 = vadd.f32 %v1363, %v1750
        %v1795 = vadd.f32 %v1366, %v1753
        %v1796 = vadd.f32 %v1371, %v1758
        %v1797 = vadd.f32 %v1374, %v1761
        %v1798 = vadd.f32 %v1379, %v1766
        %v1799 = vadd.f32 %v1382, %v1769
        %v1800 = vadd.f32 %v1387, %v1774
        %v1801 = vadd.f32 %v1390, %v1777
        %v1802 = vadd.f32 %v1395, %v1782
        %v1803 = vadd.f32 %v1398, %v1785
        %v1804 = vld [vmem:[%s5] sm:$0x1]
        %v1806 = vlaneseq
        %v1807 = vshrl.u32 %v1806, 7
        %v1808 = vsub.s32 0, %v1807
        %v1809 = vrot.slane %v1804, %v1808
        %v1811 = vadd.f32 %v1788, %v1809
        %v1812 = vadd.f32 %v1789, %v1809
        %v1813 = vadd.f32 %v1790, %v1809
        %v1814 = vadd.f32 %v1791, %v1809
        %v1815 = vadd.f32 %v1792, %v1809
        %v1816 = vadd.f32 %v1793, %v1809
        %v1817 = vadd.f32 %v1794, %v1809
        %v1818 = vadd.f32 %v1795, %v1809
        %v1819 = vadd.f32 %v1796, %v1809
        %v1820 = vadd.f32 %v1797, %v1809
        %v1821 = vadd.f32 %v1798, %v1809
        %v1822 = vadd.f32 %v1799, %v1809
        %v1823 = vadd.f32 %v1800, %v1809
        %v1824 = vadd.f32 %v1801, %v1809
        %v1825 = vadd.f32 %v1802, %v1809
        %v1826 = vadd.f32 %v1803, %v1809
        %v1827 = vmax.f32 %v1811, 0.0
        %v1828 = vmax.f32 %v1812, 0.0
        %v1829 = vmax.f32 %v1813, 0.0
        %v1830 = vmax.f32 %v1814, 0.0
        %v1831 = vmax.f32 %v1815, 0.0
        %v1832 = vmax.f32 %v1816, 0.0
        %v1833 = vmax.f32 %v1817, 0.0
        %v1834 = vmax.f32 %v1818, 0.0
        %v1835 = vmax.f32 %v1819, 0.0
        %v1836 = vmax.f32 %v1820, 0.0
        %v1837 = vmax.f32 %v1821, 0.0
        %v1838 = vmax.f32 %v1822, 0.0
        %v1839 = vmax.f32 %v1823, 0.0
        %v1840 = vmax.f32 %v1824, 0.0
        %v1841 = vmax.f32 %v1825, 0.0
        %v1842 = vmax.f32 %v1826, 0.0
        %v1843 = vpack.c.bf16 %v1828, %v1827
        %v1844 = vpack.c.bf16 %v1830, %v1829
        %v1845 = vpack.c.bf16 %v1832, %v1831
        %v1846 = vpack.c.bf16 %v1834, %v1833
        %v1847 = vpack.c.bf16 %v1836, %v1835
        %v1848 = vpack.c.bf16 %v1838, %v1837
        %v1849 = vpack.c.bf16 %v1840, %v1839
        %v1850 = vpack.c.bf16 %v1842, %v1841
        %v1851 = vld [vmem:[#allocation8] sm:$0xf]
        %v1852 = vld [vmem:[#allocation8 + $0x4] sm:$0xf]
        %v1853 = vld [vmem:[#allocation8 + $0x8] sm:$0xf]
        %v1854 = vld [vmem:[#allocation8 + $0xc] sm:$0xf]
        %v1855 = vld [vmem:[#allocation8 + $0x10] sm:$0xf]
        %v1856 = vld [vmem:[#allocation8 + $0x14] sm:$0xf]
        %v1857 = vld [vmem:[#allocation8 + $0x18] sm:$0xf]
        %v1858 = vld [vmem:[#allocation8 + $0x1c] sm:$0xf]
        %v1859 = vld [vmem:[#allocation8 + $0x20] sm:$0xf]
        %v1860 = vld [vmem:[#allocation8 + $0x24] sm:$0xf]
        %v1861 = vld [vmem:[#allocation8 + $0x28] sm:$0xf]
        %v1862 = vld [vmem:[#allocation8 + $0x2c] sm:$0xf]
        %v1863 = vld [vmem:[#allocation8 + $0x30] sm:$0xf]
        %v1864 = vld [vmem:[#allocation8 + $0x34] sm:$0xf]
        %v1865 = vld [vmem:[#allocation8 + $0x38] sm:$0xf]
        %v1866 = vld [vmem:[#allocation8 + $0x3c] sm:$0xf]
        %v1867 = vld [vmem:[%s6] sm:$0x1]
        %v1869 = vlaneseq
        %v1870 = vshrl.u32 %v1869, 7
        %v1871 = vsub.s32 0, %v1870
        %v1872 = vrot.slane %v1867, %v1871
        %v1890 = vunpack.c.l.b16 %v1851
        %v1891 = vunpack.c.l.b16 %v1852
        %v1892 = vunpack.c.l.b16 %v1853
        %v1893 = vunpack.c.l.b16 %v1854
        %v1894 = vunpack.c.l.b16 %v1855
        %v1895 = vunpack.c.l.b16 %v1856
        %v1896 = vunpack.c.l.b16 %v1857
        %v1897 = vunpack.c.l.b16 %v1858
        %v1898 = vunpack.c.l.b16 %v1859
        %v1899 = vunpack.c.l.b16 %v1860
        %v1900 = vunpack.c.l.b16 %v1861
        %v1901 = vunpack.c.l.b16 %v1862
        %v1902 = vunpack.c.l.b16 %v1863
        %v1903 = vunpack.c.l.b16 %v1864
        %v1904 = vunpack.c.l.b16 %v1865
        %v1905 = vunpack.c.l.b16 %v1866
        %v1906 = vpack.c.b16 %v1891, %v1890
        %v1907 = vpack.c.b16 %v1893, %v1892
        %v1908 = vpack.c.b16 %v1895, %v1894
        %v1909 = vpack.c.b16 %v1897, %v1896
        %v1910 = vpack.c.b16 %v1899, %v1898
        %v1911 = vpack.c.b16 %v1901, %v1900
        %v1912 = vpack.c.b16 %v1903, %v1902
        %v1913 = vpack.c.b16 %v1905, %v1904
        %1922 = vmatprep.subr.bf16.mxu0 0
        %1923 = vmatpush1.bf16.msra.mxu0 %v1913
        %1924 = vmatprep.subr.bf16.mxu0 0
        %1925 = vmatpush1.bf16.msra.mxu0 %v1912
        %1926 = vmatprep.subr.bf16.mxu0 0
        %1927 = vmatpush1.bf16.msra.mxu0 %v1911
        %1928 = vmatprep.subr.bf16.mxu0 0
        %1929 = vmatpush1.bf16.msra.mxu0 %v1910
        %1930 = vmatprep.subr.bf16.mxu0 0
        %1931 = vmatpush1.bf16.msra.mxu0 %v1909
        %1932 = vmatprep.subr.bf16.mxu0 0
        %1933 = vmatpush1.bf16.msra.mxu0 %v1908
        %1934 = vmatprep.subr.bf16.mxu0 0
        %1935 = vmatpush1.bf16.msra.mxu0 %v1907
        %1936 = vmatprep.subr.bf16.mxu0 0
        %1937 = vmatpush1.bf16.msra.mxu0 %v1906
        %1938 = vmatprep.subr.bf16.mxu0 0
        %1939 = vmatpush2.bf16.msra.mxu0 0
        %1940 = vmatprep.subr.bf16.mxu0 0
        %1941 = vmatpush2.bf16.msra.mxu0 0
        %1942 = vmatprep.subr.bf16.mxu0 0
        %1943 = vmatpush2.bf16.msra.mxu0 0
        %1944 = vmatprep.subr.bf16.mxu0 0
        %1945 = vmatpush2.bf16.msra.mxu0 0
        %1946 = vmatprep.subr.bf16.mxu0 0
        %1947 = vmatpush2.bf16.msra.mxu0 0
        %1948 = vmatprep.subr.bf16.mxu0 0
        %1949 = vmatpush2.bf16.msra.mxu0 0
        %1950 = vmatprep.subr.bf16.mxu0 0
        %1951 = vmatpush2.bf16.msra.mxu0 0
        %1952 = vmatprep.subr.bf16.mxu0 0
        %1953 = vmatpush2.bf16.msra.mxu0 0
        %1954 = vmatprep.mubr.bf16.mxu0 0
        %1955 = vmatmul.mubr.bf16.gmra.mxu0 %v1843
        %v1956 = vpop.f32.mrf.mxu0
        %v1957 = vadd.f32 %v1872, %v1956
        %v1958 = vpop.f32.mrf.mxu0
        %v1959 = vpop.f32.mrf.mxu0
        %v1960 = vpop.f32.mrf.mxu0
        %1961 = vmatprep.mubr.bf16.mxu0 0
        %1962 = vmatmul.mubr.bf16.gmra.mxu0 %v1844
        %v1963 = vpop.f32.mrf.mxu0
        %v1964 = vadd.f32 %v1872, %v1963
        %v1965 = vpop.f32.mrf.mxu0
        %v1966 = vpop.f32.mrf.mxu0
        %v1967 = vpop.f32.mrf.mxu0
        %1968 = vmatprep.mubr.bf16.mxu0 0
        %1969 = vmatmul.mubr.bf16.gmra.mxu0 %v1845
        %v1970 = vpop.f32.mrf.mxu0
        %v1971 = vadd.f32 %v1872, %v1970
        %v1972 = vpop.f32.mrf.mxu0
        %v1973 = vpop.f32.mrf.mxu0
        %v1974 = vpop.f32.mrf.mxu0
        %1975 = vmatprep.mubr.bf16.mxu0 0
        %1976 = vmatmul.mubr.bf16.gmra.mxu0 %v1846
        %v1977 = vpop.f32.mrf.mxu0
        %v1978 = vadd.f32 %v1872, %v1977
        %v1979 = vpop.f32.mrf.mxu0
        %v1980 = vpop.f32.mrf.mxu0
        %v1981 = vpop.f32.mrf.mxu0
        %1982 = vmatprep.mubr.bf16.mxu0 0
        %1983 = vmatmul.mubr.bf16.gmra.mxu0 %v1847
        %v1984 = vpop.f32.mrf.mxu0
        %v1985 = vadd.f32 %v1872, %v1984
        %v1986 = vpop.f32.mrf.mxu0
        %v1987 = vpop.f32.mrf.mxu0
        %v1988 = vpop.f32.mrf.mxu0
        %1989 = vmatprep.mubr.bf16.mxu0 0
        %1990 = vmatmul.mubr.bf16.gmra.mxu0 %v1848
        %v1991 = vpop.f32.mrf.mxu0
        %v1992 = vadd.f32 %v1872, %v1991
        %v1993 = vpop.f32.mrf.mxu0
        %v1994 = vpop.f32.mrf.mxu0
        %v1995 = vpop.f32.mrf.mxu0
        %1996 = vmatprep.mubr.bf16.mxu0 0
        %1997 = vmatmul.mubr.bf16.gmra.mxu0 %v1849
        %v1998 = vpop.f32.mrf.mxu0
        %v1999 = vadd.f32 %v1872, %v1998
        %v2000 = vpop.f32.mrf.mxu0
        %v2001 = vpop.f32.mrf.mxu0
        %v2002 = vpop.f32.mrf.mxu0
        %2003 = vmatprep.mubr.bf16.mxu0 0
        %2004 = vmatmul.mubr.bf16.gmra.mxu0 %v1850
        %v2005 = vpop.f32.mrf.mxu0
        %v2006 = vadd.f32 %v1872, %v2005
        %v2007 = vpop.f32.mrf.mxu0
        %v2008 = vpop.f32.mrf.mxu0
        %v2009 = vpop.f32.mrf.mxu0
        %2010 = vdwg.mxu0
        %v2011 = vadd.f32 %v1957, %v342
        %v2012 = vadd.f32 %v1964, %v343
        %v2013 = vadd.f32 %v1971, %v344
        %v2014 = vadd.f32 %v1978, %v345
        %v2015 = vadd.f32 %v1985, %v346
        %v2016 = vadd.f32 %v1992, %v347
        %v2017 = vadd.f32 %v1999, %v348
        %v2018 = vadd.f32 %v2006, %v349
        %v2019 = vmax.f32 %v2011, 0.0
        %v2020 = vmax.f32 %v2012, 0.0
        %v2021 = vmax.f32 %v2013, 0.0
        %v2022 = vmax.f32 %v2014, 0.0
        %v2023 = vmax.f32 %v2015, 0.0
        %v2024 = vmax.f32 %v2016, 0.0
        %v2025 = vmax.f32 %v2017, 0.0
        %v2026 = vmax.f32 %v2018, 0.0
        %2027 = vst [vmem:[%s340] sm:$0xff] %v2019
        %2028 = vst [vmem:[%s340 + $0x8] sm:$0xff] %v2020
        %2029 = vst [vmem:[%s340 + $0x10] sm:$0xff] %v2021
        %2030 = vst [vmem:[%s340 + $0x18] sm:$0xff] %v2022
        %2031 = vst [vmem:[%s340 + $0x20] sm:$0xff] %v2023
        %2032 = vst [vmem:[%s340 + $0x28] sm:$0xff] %v2024
        %2033 = vst [vmem:[%s340 + $0x30] sm:$0xff] %v2025
        %2034 = vst [vmem:[%s340 + $0x38] sm:$0xff] %v2026
        %s2035 = sand.u32 %s186, 1
        %s2036 = scalar_lea.sflag [#allocation4], %s2035
        %s2037 = sand.u32 %s186, 1
        %s2038 = smul.addr %s2037, 64
        %s2039 = scalar_lea.vmem [#allocation10], %s2038
        // Predicated region
        $region65: #{tpu_custom_call.1} parent=47 // pred_check
          %p2040 = pneg %p196
        $region66: #{tpu_custom_call.1} parent=47 // pred_check_branch
          %2042 = sbr.rel (%p2040) target = $region68
        $region67: #{tpu_custom_call.1} parent=47 // pred_region
          %s2044 = ssub.s32 1024, 1024
          %2045 = vsyncadd %s2036, %s2044
          %s2046 = smul.addr %s26, 8
          %s2047 = smul.addr %s2046, 128
          %s2048 = scalar_lea.hbm %s7, %s2047
          %s2049 = sshll.u32 %s2039, 4
          %s2050 = int_to_ptr.vmem [resolvable:$true] %s2049
          %2055 = dma.vmem_to_hbm [thread:$0]  %s2050, 1024, %s2048, %s2036, 128, 128, 8
        $region68: #{tpu_custom_call.1} parent=47 // pred_fallthru
          _
      $region48: #{tpu_custom_call.1} parent=5 // pred_fallthru
        _
      %p2056 = scmp.le.s32.totalorder 2, %s21
      // Predicated region
      $region69: #{tpu_custom_call.1} parent=5 // pred_check
        %p2057 = pneg %p2056
      $region70: #{tpu_custom_call.1} parent=5 // pred_check_branch
        %2059 = sbr.rel (%p2057) target = $region72
      $region71: #{tpu_custom_call.1} parent=5 // pred_region
        %s2060 = ssub.s32 %s21, 2
        // Predicated region
        $region73: #{tpu_custom_call.1} parent=71 // pred_check
          %p2061 = pneg %p202
        $region74: #{tpu_custom_call.1} parent=71 // pred_check_branch
          %2063 = sbr.rel (%p2061) target = $region76
        $region75: #{tpu_custom_call.1} parent=71 // pred_region
          %s2064 = sand.u32 %s187, 1
          %s2065 = scalar_lea.sflag [#allocation4], %s2064
          %s2066 = sand.u32 %s187, 1
          %s2067 = smul.addr %s2066, 64
          %s2068 = scalar_lea.vmem [#allocation10], %s2067
          %2069 = dma.done %s2065, 1024
        $region76: #{tpu_custom_call.1} parent=71 // pred_fallthru
          _
      $region72: #{tpu_custom_call.1} parent=5 // pred_fallthru
        _
    $region6: #{tpu_custom_call.1} parent=1 // loop_footer
      %s25 = sadd.s32 1, %s21
    $region7: #{tpu_custom_call.1} parent=1 // loop_footer_branch
      %20 = sbr.rel target = $region3
    $region8: #{tpu_custom_call.1} parent=1 // loop_exit
      _
    %2070 = vsyncpa [#allocation3], 1
    %s2071 = scalar_lea.sflag [#allocation3], 1
    %2072 = vsyncpa %s2071, 1
    %2073 = vsyncpa [#allocation6], 1
    %2074 = vsyncpa [#allocation9], 1
    %2075 = vsyncpa [#allocation4], 1
    %s2076 = scalar_lea.sflag [#allocation4], 1
    %2077 = vsyncpa %s2076, 1

</llo_original>
